<compile_context>
chip_gen: v7x
topology: tpu7x:2x2x1
jax: 0.10.0
libtpu: 0.0.40
codegen_flags: <defaults>
</compile_context>

<pallas_src>
import functools

import jax
import jax.numpy as jnp
from jax import lax
from jax.experimental import pallas as pl
from jax.experimental.pallas import tpu as pltpu

CHUNK = 8  # sublane-aligned store granularity


def _round_up(x, m):
    return (x + m - 1) // m * m


def gru_kernel(emb_ref, h0_ref, wih_ref, whh_ref, bias_ref, bhn_ref,
               out_ref, hn_ref, xp_ref, *, seq_len):
    """Single-layer GRU recurrence (batch=1), lane-padded hidden dim.

    emb_ref  : (Sp, Hp)   bf16  embedded inputs (rows >= seq_len are pad)
    h0_ref   : (1, Hp)    f32   initial hidden state (padded lanes zero)
    wih_ref  : (Hp, 3Hp)  bf16  [W_ir^T | W_iz^T | W_in^T]
    whh_ref  : (Hp, 3Hp)  bf16  [W_hr^T | W_hz^T | W_hn^T]
    bias_ref : (1, 3Hp)   f32   [b_ir+b_hr | b_iz+b_hz | b_in]   (folded)
    bhn_ref  : (1, Hp)    f32   b_hn (must stay inside r*(...))
    out_ref  : (Sp, Hp)   f32   per-step hidden states (rows >= seq_len = 0)
    hn_ref   : (1, Hp)    f32   final hidden state
    xp_ref   : (Sp, 3Hp)  f32   scratch: hoisted input projection
    """
    Sp, Hp = out_ref.shape
    n_chunks = Sp // CHUNK

    # --- Hoisted input projection: one big MXU matmul for all timesteps. ---
    xp_ref[...] = (
        jnp.dot(emb_ref[...], wih_ref[...], preferred_element_type=jnp.float32)
        + bias_ref[...])

    bhn = bhn_ref[...]  # (1, Hp): one row, cheap to keep resident

    def cell(xp_row, h):
        # One fused recurrent matmul per step: (1,Hp) @ (Hp,3Hp), f32 accum.
        # whh_ref is read inside the dot (NOT hoisted) to avoid pinning ~24
        # vregs across the unrolled chunk.
        hp = jnp.dot(h.astype(jnp.bfloat16), whh_ref[...],
                     preferred_element_type=jnp.float32)
        # Fused r/z sigmoid: one EUP call on (1, 2Hp); slices are 128-lane
        # aligned, hence free.
        rz = jax.nn.sigmoid(xp_row[:, :2 * Hp] + hp[:, :2 * Hp])
        r = rz[:, :Hp]
        z = rz[:, Hp:]
        n = jnp.tanh(xp_row[:, 2 * Hp:] + r * (hp[:, 2 * Hp:] + bhn))
        return (1.0 - z) * n + z * h

    def chunk_body(c, h):
        base = pl.multiple_of(c * CHUNK, CHUNK)
        xp_chunk = xp_ref[pl.ds(base, CHUNK), :]          # (8, 3Hp)
        rows = []
        for i in range(CHUNK):                            # statically unrolled
            valid = base + i < seq_len                    # scalar predicate
            h_new = cell(xp_chunk[i:i + 1, :], h)
            h = jnp.where(valid, h_new, h)                # gate update past S
            rows.append(jnp.where(valid, h, 0.0))         # zero invalid rows
        # one lane-dense, sublane-aligned, unmasked (8, Hp) store per chunk
        out_ref[pl.ds(base, CHUNK), :] = jnp.concatenate(rows, axis=0)
        return h

    h = h0_ref[...]
    h = lax.fori_loop(0, n_chunks, chunk_body, h,
                      unroll=True if n_chunks <= 8 else 2)
    hn_ref[...] = h


def _pad2(w, Hp):
    return jnp.zeros((Hp, Hp), jnp.float32).at[:w.shape[0], :w.shape[1]].set(w)


def _pad_row(b, Hp):
    b = b.reshape(1, -1)
    return jnp.zeros((1, Hp), jnp.float32).at[:, :b.shape[1]].set(b)


def pack_params(params):
    """Pad to 128 lanes, fuse per-gate weights to (Hp,3Hp), fold biases, cast bf16.

    Run ONCE at init (hoisted out of the forward path per perf review).
    Returns a dict of arrays only (jit-friendly pytree).
    """
    emb = params["embedding"]                     # (V, H) f32
    V, H = emb.shape
    Hp = _round_up(H, 128)

    emb_p = jnp.zeros((V, Hp), jnp.bfloat16).at[:, :H].set(
        emb.astype(jnp.bfloat16))

    wih = jnp.concatenate([_pad2(params["w_ih"][g], Hp) for g in range(3)],
                          axis=1).astype(jnp.bfloat16)          # (Hp, 3Hp)
    whh = jnp.concatenate([_pad2(params["w_hh"][g], Hp) for g in range(3)],
                          axis=1).astype(jnp.bfloat16)          # (Hp, 3Hp)

    b_r = _pad_row(params["b_ih"][0] + params["b_hh"][0], Hp)
    b_z = _pad_row(params["b_ih"][1] + params["b_hh"][1], Hp)
    b_n = _pad_row(params["b_ih"][2], Hp)
    bias_fold = jnp.concatenate([b_r, b_z, b_n], axis=1)        # (1, 3Hp) f32
    bhn = _pad_row(params["b_hh"][2], Hp)                       # (1, Hp)  f32

    return {"emb_table": emb_p, "wih": wih, "whh": whh,
            "bias_fold": bias_fold, "bhn": bhn}


@functools.partial(jax.jit, static_argnames=("hidden_size",))
def encoder_rnn_forward(word_inputs, hidden, packed, hidden_size):
    """Mirrors EncoderRNN.forward(word_inputs, hidden).

    word_inputs: (S,) int32
    hidden     : (1, 1, H) float32  (n_layers=1, batch=1)
    packed     : output of pack_params (computed once at init)
    returns (output (S, 1, H), hidden (1, 1, H))
    """
    H = hidden_size
    Hp = packed["emb_table"].shape[1]
    S = word_inputs.shape[0]
    Sp = _round_up(max(S, CHUNK), CHUNK)

    # Pad the token ids (not the gathered rows): one gather, no extra pad copy.
    # Padded rows are never consumed (predicated inside the kernel).
    ids = jnp.zeros((Sp,), jnp.int32).at[:S].set(word_inputs)
    emb = packed["emb_table"][ids]                                 # (Sp, Hp) bf16

    h0 = jnp.zeros((1, Hp), jnp.float32).at[:, :H].set(
        hidden.reshape(1, H).astype(jnp.float32))

    vmem = pl.BlockSpec(memory_space=pltpu.MemorySpace.VMEM)
    out, h_n = pl.pallas_call(
        functools.partial(gru_kernel, seq_len=S),
        out_shape=(
            jax.ShapeDtypeStruct((Sp, Hp), jnp.float32),
            jax.ShapeDtypeStruct((1, Hp), jnp.float32),
        ),
        in_specs=[vmem] * 6,
        out_specs=(vmem, vmem),
        scratch_shapes=[pltpu.VMEM((Sp, 3 * Hp), jnp.float32)],
        # Safe on all chips (<= v7x's 64 MiB physical). For long S: raise
        # toward ~100 MiB on v5e/v6e, cap ~48 MiB (or chunk S) on v7x.
        compiler_params=pltpu.CompilerParams(
            vmem_limit_bytes=32 * 1024 * 1024),
    )(emb, h0, packed["wih"], packed["whh"], packed["bias_fold"],
      packed["bhn"])

    output = out[:S, :H].reshape(S, 1, H)
    hidden_out = h_n[:, :H].reshape(1, 1, H)
    return output, hidden_out


def init_params(key, input_size, hidden_size):
    """Deterministic parameter init (PyTorch-like uniform(-1/sqrt(H), 1/sqrt(H)))."""
    H = hidden_size
    k = 1.0 / jnp.sqrt(jnp.float32(H))
    keys = jax.random.split(key, 6)
    emb = jax.random.normal(keys[0], (input_size, H), jnp.float32)
    # Per-gate transposed stacks (3, H, H) in gate order [r, z, n] so x @ W.
    w_ih = jax.random.uniform(keys[1], (3, H, H), jnp.float32, -k, k)
    w_hh = jax.random.uniform(keys[2], (3, H, H), jnp.float32, -k, k)
    b_ih = jax.random.uniform(keys[3], (3, 1, H), jnp.float32, -k, k)
    b_hh = jax.random.uniform(keys[4], (3, 1, H), jnp.float32, -k, k)
    return {"embedding": emb, "w_ih": w_ih, "w_hh": w_hh,
            "b_ih": b_ih, "b_hh": b_hh}


def reference_forward(word_inputs, hidden, params):
    """Pure-JAX reference (bf16 matmul inputs, f32 accum/elementwise)."""
    H = params["embedding"].shape[1]
    emb = params["embedding"].astype(jnp.bfloat16)[word_inputs]     # (S, H)
    h = hidden.reshape(1, H).astype(jnp.float32)
    wir, wiz, win = [w.astype(jnp.bfloat16) for w in params["w_ih"]]
    whr, whz, whn = [w.astype(jnp.bfloat16) for w in params["w_hh"]]
    bir, biz, bin_ = params["b_ih"]
    bhr, bhz, bhn = params["b_hh"]

    def dot(a, b):
        return jnp.dot(a.astype(jnp.bfloat16), b,
                       preferred_element_type=jnp.float32)

    def step(h, x):
        x = x[None, :]
        r = jax.nn.sigmoid(dot(x, wir) + bir + dot(h, whr) + bhr)
        z = jax.nn.sigmoid(dot(x, wiz) + biz + dot(h, whz) + bhz)
        n = jnp.tanh(dot(x, win) + bin_ + r * (dot(h, whn) + bhn))
        h_new = (1.0 - z) * n + z * h
        return h_new, h_new[0]

    h_n, outs = lax.scan(step, h, emb)
    return outs.reshape(-1, 1, H), h_n.reshape(1, 1, H)


if __name__ == "__main__":
    input_size = 16      # vocab size
    hidden_size = 32
    seq_len = 8
    n_layers = 1

    key = jax.random.PRNGKey(0)
    k_params, k_tokens = jax.random.split(key)
    params = init_params(k_params, input_size, hidden_size)
    packed = jax.tree_util.tree_map(jax.block_until_ready, pack_params(params))

    word_inputs = jax.random.randint(k_tokens, (seq_len,), 0, input_size,
                                     dtype=jnp.int32)
    hidden = jnp.zeros((n_layers, 1, hidden_size), jnp.float32)  # init_hidden()

    output, h_n = encoder_rnn_forward(word_inputs, hidden, packed,
                                      hidden_size=hidden_size)
    output = jax.block_until_ready(output)
    h_n = jax.block_until_ready(h_n)

    # sanity check vs pure-JAX reference
    ref_out, ref_h = reference_forward(word_inputs, hidden, params)
    assert output.shape == (seq_len, 1, hidden_size)
    assert h_n.shape == (n_layers, 1, hidden_size)
    assert jnp.allclose(output, ref_out, atol=1e-3, rtol=1e-3), (
        float(jnp.max(jnp.abs(output - ref_out))))
    assert jnp.allclose(h_n, ref_h, atol=1e-3, rtol=1e-3), (
        float(jnp.max(jnp.abs(h_n - ref_h))))

    print("KERNEL_OK")
</pallas_src>

<mosaic_0001>
module attributes {stable_mosaic.version = 11 : i64} {
  func.func @gru_kernel(%arg0: memref<8x128xbf16, #tpu.memory_space<vmem>>, %arg1: memref<1x128xf32, #tpu.memory_space<vmem>>, %arg2: memref<128x384xbf16, #tpu.memory_space<vmem>>, %arg3: memref<128x384xbf16, #tpu.memory_space<vmem>>, %arg4: memref<1x384xf32, #tpu.memory_space<vmem>>, %arg5: memref<1x128xf32, #tpu.memory_space<vmem>>, %arg6: memref<8x128xf32, #tpu.memory_space<vmem>>, %arg7: memref<1x128xf32, #tpu.memory_space<vmem>>, %arg8: memref<8x384xf32, #tpu.memory_space<vmem>>) attributes {dimension_semantics = [], scalar_prefetch = 0 : i64, scratch_operands = 1 : i64, tpu.core_type = #tpu.core_type<tc>} {
    %c0 = arith.constant 0 : index
    %c0_0 = arith.constant 0 : index
    %0 = vector.load %arg0[%c0, %c0_0] : memref<8x128xbf16, #tpu.memory_space<vmem>>, vector<8x128xbf16>
    %c0_1 = arith.constant 0 : index
    %c0_2 = arith.constant 0 : index
    %1 = vector.load %arg2[%c0_1, %c0_2] : memref<128x384xbf16, #tpu.memory_space<vmem>>, vector<128x384xbf16>
    %cst = arith.constant dense<0.000000e+00> : vector<8x384xf32>
    %2 = tpu.matmul %0, %1, %cst {dimension_numbers = #tpu.dot_dimension_numbers<[1], [0], [0], [1], [0, 0, 1, 1], [], []>} : vector<8x128xbf16>, vector<128x384xbf16>, vector<8x384xf32> -> vector<8x384xf32>
    %c0_3 = arith.constant 0 : index
    %c0_4 = arith.constant 0 : index
    %3 = vector.load %arg4[%c0_3, %c0_4] : memref<1x384xf32, #tpu.memory_space<vmem>>, vector<1x384xf32>
    %4 = vector.broadcast %3 : vector<1x384xf32> to vector<8x384xf32>
    %5 = arith.addf %2, %4 : vector<8x384xf32>
    %c0_5 = arith.constant 0 : index
    %c0_6 = arith.constant 0 : index
    %6 = vector.load %arg8[%c0_5, %c0_6] : memref<8x384xf32, #tpu.memory_space<vmem>>, vector<8x384xf32>
    tpu.vector_store %arg8[%c0_5, %c0_6], %5 {strides = array<i32>} : memref<8x384xf32, #tpu.memory_space<vmem>>, vector<8x384xf32>,
    %c0_7 = arith.constant 0 : index
    %c0_8 = arith.constant 0 : index
    %7 = vector.load %arg5[%c0_7, %c0_8] : memref<1x128xf32, #tpu.memory_space<vmem>>, vector<1x128xf32>
    %c0_9 = arith.constant 0 : index
    %c0_10 = arith.constant 0 : index
    %8 = vector.load %arg1[%c0_9, %c0_10] : memref<1x128xf32, #tpu.memory_space<vmem>>, vector<1x128xf32>
    %c0_i32 = arith.constant 0 : i32
    %c8_i32 = arith.constant 8 : i32
    %9 = arith.muli %c0_i32, %c8_i32 : i32
    %10 = tpu.assume_multiple %9, 8 : i32
    %11 = arith.index_cast %10 : i32 to index
    %c0_11 = arith.constant 0 : index
    %12 = vector.load %arg8[%11, %c0_11] : memref<8x384xf32, #tpu.memory_space<vmem>>, vector<8x384xf32>
    %c0_i32_12 = arith.constant 0 : i32
    %13 = arith.addi %10, %c0_i32_12 : i32
    %c8_i32_13 = arith.constant 8 : i32
    %14 = arith.cmpi slt, %13, %c8_i32_13 : i32
    %15 = vector.extract_strided_slice %12 {offsets = [0, 0], sizes = [1, 384], strides = [1, 1]} : vector<8x384xf32> to vector<1x384xf32>
    %16 = arith.truncf %8 : vector<1x128xf32> to vector<1x128xbf16>
    %c0_14 = arith.constant 0 : index
    %c0_15 = arith.constant 0 : index
    %17 = vector.load %arg3[%c0_14, %c0_15] : memref<128x384xbf16, #tpu.memory_space<vmem>>, vector<128x384xbf16>
    %cst_16 = arith.constant dense<0.000000e+00> : vector<1x384xf32>
    %18 = tpu.matmul %16, %17, %cst_16 {dimension_numbers = #tpu.dot_dimension_numbers<[1], [0], [0], [1], [0, 0, 1, 1], [], []>} : vector<1x128xbf16>, vector<128x384xbf16>, vector<1x384xf32> -> vector<1x384xf32>
    %19 = vector.extract_strided_slice %15 {offsets = [0, 0], sizes = [1, 256], strides = [1, 1]} : vector<1x384xf32> to vector<1x256xf32>
    %20 = vector.extract_strided_slice %18 {offsets = [0, 0], sizes = [1, 256], strides = [1, 1]} : vector<1x384xf32> to vector<1x256xf32>
    %21 = arith.addf %19, %20 : vector<1x256xf32>
    %22 = arith.negf %21 : vector<1x256xf32>
    %23 = math.exp %22 : vector<1x256xf32>
    %cst_17 = arith.constant 1.000000e+00 : f32
    %24 = vector.broadcast %cst_17 : f32 to vector<1x256xf32>
    %25 = arith.addf %24, %23 : vector<1x256xf32>
    %26 = arith.divf %24, %25 : vector<1x256xf32>
    %27 = vector.extract_strided_slice %26 {offsets = [0, 0], sizes = [1, 128], strides = [1, 1]} : vector<1x256xf32> to vector<1x128xf32>
    %28 = vector.extract_strided_slice %26 {offsets = [0, 128], sizes = [1, 128], strides = [1, 1]} : vector<1x256xf32> to vector<1x128xf32>
    %29 = vector.extract_strided_slice %15 {offsets = [0, 256], sizes = [1, 128], strides = [1, 1]} : vector<1x384xf32> to vector<1x128xf32>
    %30 = vector.extract_strided_slice %18 {offsets = [0, 256], sizes = [1, 128], strides = [1, 1]} : vector<1x384xf32> to vector<1x128xf32>
    %31 = arith.addf %30, %7 : vector<1x128xf32>
    %32 = arith.mulf %27, %31 : vector<1x128xf32>
    %33 = arith.addf %29, %32 : vector<1x128xf32>
    %34 = math.tanh %33 : vector<1x128xf32>
    %cst_18 = arith.constant 1.000000e+00 : f32
    %35 = vector.broadcast %cst_18 : f32 to vector<1x128xf32>
    %36 = arith.subf %35, %28 : vector<1x128xf32>
    %37 = arith.mulf %36, %34 : vector<1x128xf32>
    %38 = arith.mulf %28, %8 : vector<1x128xf32>
    %39 = arith.addf %37, %38 : vector<1x128xf32>
    %40 = arith.select %14, %39, %8 : vector<1x128xf32>
    %cst_19 = arith.constant 0.000000e+00 : f32
    %41 = vector.broadcast %cst_19 : f32 to vector<1x128xf32>
    %42 = arith.select %14, %40, %41 : vector<1x128xf32>
    %c1_i32 = arith.constant 1 : i32
    %43 = arith.addi %10, %c1_i32 : i32
    %c8_i32_20 = arith.constant 8 : i32
    %44 = arith.cmpi slt, %43, %c8_i32_20 : i32
    %45 = vector.extract_strided_slice %12 {offsets = [1, 0], sizes = [1, 384], strides = [1, 1]} : vector<8x384xf32> to vector<1x384xf32>
    %46 = arith.truncf %40 : vector<1x128xf32> to vector<1x128xbf16>
    %c0_21 = arith.constant 0 : index
    %c0_22 = arith.constant 0 : index
    %47 = vector.load %arg3[%c0_21, %c0_22] : memref<128x384xbf16, #tpu.memory_space<vmem>>, vector<128x384xbf16>
    %cst_23 = arith.constant dense<0.000000e+00> : vector<1x384xf32>
    %48 = tpu.matmul %46, %47, %cst_23 {dimension_numbers = #tpu.dot_dimension_numbers<[1], [0], [0], [1], [0, 0, 1, 1], [], []>} : vector<1x128xbf16>, vector<128x384xbf16>, vector<1x384xf32> -> vector<1x384xf32>
    %49 = vector.extract_strided_slice %45 {offsets = [0, 0], sizes = [1, 256], strides = [1, 1]} : vector<1x384xf32> to vector<1x256xf32>
    %50 = vector.extract_strided_slice %48 {offsets = [0, 0], sizes = [1, 256], strides = [1, 1]} : vector<1x384xf32> to vector<1x256xf32>
    %51 = arith.addf %49, %50 : vector<1x256xf32>
    %52 = arith.negf %51 : vector<1x256xf32>
    %53 = math.exp %52 : vector<1x256xf32>
    %cst_24 = arith.constant 1.000000e+00 : f32
    %54 = vector.broadcast %cst_24 : f32 to vector<1x256xf32>
    %55 = arith.addf %54, %53 : vector<1x256xf32>
    %56 = arith.divf %54, %55 : vector<1x256xf32>
    %57 = vector.extract_strided_slice %56 {offsets = [0, 0], sizes = [1, 128], strides = [1, 1]} : vector<1x256xf32> to vector<1x128xf32>
    %58 = vector.extract_strided_slice %56 {offsets = [0, 128], sizes = [1, 128], strides = [1, 1]} : vector<1x256xf32> to vector<1x128xf32>
    %59 = vector.extract_strided_slice %45 {offsets = [0, 256], sizes = [1, 128], strides = [1, 1]} : vector<1x384xf32> to vector<1x128xf32>
    %60 = vector.extract_strided_slice %48 {offsets = [0, 256], sizes = [1, 128], strides = [1, 1]} : vector<1x384xf32> to vector<1x128xf32>
    %61 = arith.addf %60, %7 : vector<1x128xf32>
    %62 = arith.mulf %57, %61 : vector<1x128xf32>
    %63 = arith.addf %59, %62 : vector<1x128xf32>
    %64 = math.tanh %63 : vector<1x128xf32>
    %cst_25 = arith.constant 1.000000e+00 : f32
    %65 = vector.broadcast %cst_25 : f32 to vector<1x128xf32>
    %66 = arith.subf %65, %58 : vector<1x128xf32>
    %67 = arith.mulf %66, %64 : vector<1x128xf32>
    %68 = arith.mulf %58, %40 : vector<1x128xf32>
    %69 = arith.addf %67, %68 : vector<1x128xf32>
    %70 = arith.select %44, %69, %40 : vector<1x128xf32>
    %cst_26 = arith.constant 0.000000e+00 : f32
    %71 = vector.broadcast %cst_26 : f32 to vector<1x128xf32>
    %72 = arith.select %44, %70, %71 : vector<1x128xf32>
    %c2_i32 = arith.constant 2 : i32
    %73 = arith.addi %10, %c2_i32 : i32
    %c8_i32_27 = arith.constant 8 : i32
    %74 = arith.cmpi slt, %73, %c8_i32_27 : i32
    %75 = vector.extract_strided_slice %12 {offsets = [2, 0], sizes = [1, 384], strides = [1, 1]} : vector<8x384xf32> to vector<1x384xf32>
    %76 = arith.truncf %70 : vector<1x128xf32> to vector<1x128xbf16>
    %c0_28 = arith.constant 0 : index
    %c0_29 = arith.constant 0 : index
    %77 = vector.load %arg3[%c0_28, %c0_29] : memref<128x384xbf16, #tpu.memory_space<vmem>>, vector<128x384xbf16>
    %cst_30 = arith.constant dense<0.000000e+00> : vector<1x384xf32>
    %78 = tpu.matmul %76, %77, %cst_30 {dimension_numbers = #tpu.dot_dimension_numbers<[1], [0], [0], [1], [0, 0, 1, 1], [], []>} : vector<1x128xbf16>, vector<128x384xbf16>, vector<1x384xf32> -> vector<1x384xf32>
    %79 = vector.extract_strided_slice %75 {offsets = [0, 0], sizes = [1, 256], strides = [1, 1]} : vector<1x384xf32> to vector<1x256xf32>
    %80 = vector.extract_strided_slice %78 {offsets = [0, 0], sizes = [1, 256], strides = [1, 1]} : vector<1x384xf32> to vector<1x256xf32>
    %81 = arith.addf %79, %80 : vector<1x256xf32>
    %82 = arith.negf %81 : vector<1x256xf32>
    %83 = math.exp %82 : vector<1x256xf32>
    %cst_31 = arith.constant 1.000000e+00 : f32
    %84 = vector.broadcast %cst_31 : f32 to vector<1x256xf32>
    %85 = arith.addf %84, %83 : vector<1x256xf32>
    %86 = arith.divf %84, %85 : vector<1x256xf32>
    %87 = vector.extract_strided_slice %86 {offsets = [0, 0], sizes = [1, 128], strides = [1, 1]} : vector<1x256xf32> to vector<1x128xf32>
    %88 = vector.extract_strided_slice %86 {offsets = [0, 128], sizes = [1, 128], strides = [1, 1]} : vector<1x256xf32> to vector<1x128xf32>
    %89 = vector.extract_strided_slice %75 {offsets = [0, 256], sizes = [1, 128], strides = [1, 1]} : vector<1x384xf32> to vector<1x128xf32>
    %90 = vector.extract_strided_slice %78 {offsets = [0, 256], sizes = [1, 128], strides = [1, 1]} : vector<1x384xf32> to vector<1x128xf32>
    %91 = arith.addf %90, %7 : vector<1x128xf32>
    %92 = arith.mulf %87, %91 : vector<1x128xf32>
    %93 = arith.addf %89, %92 : vector<1x128xf32>
    %94 = math.tanh %93 : vector<1x128xf32>
    %cst_32 = arith.constant 1.000000e+00 : f32
    %95 = vector.broadcast %cst_32 : f32 to vector<1x128xf32>
    %96 = arith.subf %95, %88 : vector<1x128xf32>
    %97 = arith.mulf %96, %94 : vector<1x128xf32>
    %98 = arith.mulf %88, %70 : vector<1x128xf32>
    %99 = arith.addf %97, %98 : vector<1x128xf32>
    %100 = arith.select %74, %99, %70 : vector<1x128xf32>
    %cst_33 = arith.constant 0.000000e+00 : f32
    %101 = vector.broadcast %cst_33 : f32 to vector<1x128xf32>
    %102 = arith.select %74, %100, %101 : vector<1x128xf32>
    %c3_i32 = arith.constant 3 : i32
    %103 = arith.addi %10, %c3_i32 : i32
    %c8_i32_34 = arith.constant 8 : i32
    %104 = arith.cmpi slt, %103, %c8_i32_34 : i32
    %105 = vector.extract_strided_slice %12 {offsets = [3, 0], sizes = [1, 384], strides = [1, 1]} : vector<8x384xf32> to vector<1x384xf32>
    %106 = arith.truncf %100 : vector<1x128xf32> to vector<1x128xbf16>
    %c0_35 = arith.constant 0 : index
    %c0_36 = arith.constant 0 : index
    %107 = vector.load %arg3[%c0_35, %c0_36] : memref<128x384xbf16, #tpu.memory_space<vmem>>, vector<128x384xbf16>
    %cst_37 = arith.constant dense<0.000000e+00> : vector<1x384xf32>
    %108 = tpu.matmul %106, %107, %cst_37 {dimension_numbers = #tpu.dot_dimension_numbers<[1], [0], [0], [1], [0, 0, 1, 1], [], []>} : vector<1x128xbf16>, vector<128x384xbf16>, vector<1x384xf32> -> vector<1x384xf32>
    %109 = vector.extract_strided_slice %105 {offsets = [0, 0], sizes = [1, 256], strides = [1, 1]} : vector<1x384xf32> to vector<1x256xf32>
    %110 = vector.extract_strided_slice %108 {offsets = [0, 0], sizes = [1, 256], strides = [1, 1]} : vector<1x384xf32> to vector<1x256xf32>
    %111 = arith.addf %109, %110 : vector<1x256xf32>
    %112 = arith.negf %111 : vector<1x256xf32>
    %113 = math.exp %112 : vector<1x256xf32>
    %cst_38 = arith.constant 1.000000e+00 : f32
    %114 = vector.broadcast %cst_38 : f32 to vector<1x256xf32>
    %115 = arith.addf %114, %113 : vector<1x256xf32>
    %116 = arith.divf %114, %115 : vector<1x256xf32>
    %117 = vector.extract_strided_slice %116 {offsets = [0, 0], sizes = [1, 128], strides = [1, 1]} : vector<1x256xf32> to vector<1x128xf32>
    %118 = vector.extract_strided_slice %116 {offsets = [0, 128], sizes = [1, 128], strides = [1, 1]} : vector<1x256xf32> to vector<1x128xf32>
    %119 = vector.extract_strided_slice %105 {offsets = [0, 256], sizes = [1, 128], strides = [1, 1]} : vector<1x384xf32> to vector<1x128xf32>
    %120 = vector.extract_strided_slice %108 {offsets = [0, 256], sizes = [1, 128], strides = [1, 1]} : vector<1x384xf32> to vector<1x128xf32>
    %121 = arith.addf %120, %7 : vector<1x128xf32>
    %122 = arith.mulf %117, %121 : vector<1x128xf32>
    %123 = arith.addf %119, %122 : vector<1x128xf32>
    %124 = math.tanh %123 : vector<1x128xf32>
    %cst_39 = arith.constant 1.000000e+00 : f32
    %125 = vector.broadcast %cst_39 : f32 to vector<1x128xf32>
    %126 = arith.subf %125, %118 : vector<1x128xf32>
    %127 = arith.mulf %126, %124 : vector<1x128xf32>
    %128 = arith.mulf %118, %100 : vector<1x128xf32>
    %129 = arith.addf %127, %128 : vector<1x128xf32>
    %130 = arith.select %104, %129, %100 : vector<1x128xf32>
    %cst_40 = arith.constant 0.000000e+00 : f32
    %131 = vector.broadcast %cst_40 : f32 to vector<1x128xf32>
    %132 = arith.select %104, %130, %131 : vector<1x128xf32>
    %c4_i32 = arith.constant 4 : i32
    %133 = arith.addi %10, %c4_i32 : i32
    %c8_i32_41 = arith.constant 8 : i32
    %134 = arith.cmpi slt, %133, %c8_i32_41 : i32
    %135 = vector.extract_strided_slice %12 {offsets = [4, 0], sizes = [1, 384], strides = [1, 1]} : vector<8x384xf32> to vector<1x384xf32>
    %136 = arith.truncf %130 : vector<1x128xf32> to vector<1x128xbf16>
    %c0_42 = arith.constant 0 : index
    %c0_43 = arith.constant 0 : index
    %137 = vector.load %arg3[%c0_42, %c0_43] : memref<128x384xbf16, #tpu.memory_space<vmem>>, vector<128x384xbf16>
    %cst_44 = arith.constant dense<0.000000e+00> : vector<1x384xf32>
    %138 = tpu.matmul %136, %137, %cst_44 {dimension_numbers = #tpu.dot_dimension_numbers<[1], [0], [0], [1], [0, 0, 1, 1], [], []>} : vector<1x128xbf16>, vector<128x384xbf16>, vector<1x384xf32> -> vector<1x384xf32>
    %139 = vector.extract_strided_slice %135 {offsets = [0, 0], sizes = [1, 256], strides = [1, 1]} : vector<1x384xf32> to vector<1x256xf32>
    %140 = vector.extract_strided_slice %138 {offsets = [0, 0], sizes = [1, 256], strides = [1, 1]} : vector<1x384xf32> to vector<1x256xf32>
    %141 = arith.addf %139, %140 : vector<1x256xf32>
    %142 = arith.negf %141 : vector<1x256xf32>
    %143 = math.exp %142 : vector<1x256xf32>
    %cst_45 = arith.constant 1.000000e+00 : f32
    %144 = vector.broadcast %cst_45 : f32 to vector<1x256xf32>
    %145 = arith.addf %144, %143 : vector<1x256xf32>
    %146 = arith.divf %144, %145 : vector<1x256xf32>
    %147 = vector.extract_strided_slice %146 {offsets = [0, 0], sizes = [1, 128], strides = [1, 1]} : vector<1x256xf32> to vector<1x128xf32>
    %148 = vector.extract_strided_slice %146 {offsets = [0, 128], sizes = [1, 128], strides = [1, 1]} : vector<1x256xf32> to vector<1x128xf32>
    %149 = vector.extract_strided_slice %135 {offsets = [0, 256], sizes = [1, 128], strides = [1, 1]} : vector<1x384xf32> to vector<1x128xf32>
    %150 = vector.extract_strided_slice %138 {offsets = [0, 256], sizes = [1, 128], strides = [1, 1]} : vector<1x384xf32> to vector<1x128xf32>
    %151 = arith.addf %150, %7 : vector<1x128xf32>
    %152 = arith.mulf %147, %151 : vector<1x128xf32>
    %153 = arith.addf %149, %152 : vector<1x128xf32>
    %154 = math.tanh %153 : vector<1x128xf32>
    %cst_46 = arith.constant 1.000000e+00 : f32
    %155 = vector.broadcast %cst_46 : f32 to vector<1x128xf32>
    %156 = arith.subf %155, %148 : vector<1x128xf32>
    %157 = arith.mulf %156, %154 : vector<1x128xf32>
    %158 = arith.mulf %148, %130 : vector<1x128xf32>
    %159 = arith.addf %157, %158 : vector<1x128xf32>
    %160 = arith.select %134, %159, %130 : vector<1x128xf32>
    %cst_47 = arith.constant 0.000000e+00 : f32
    %161 = vector.broadcast %cst_47 : f32 to vector<1x128xf32>
    %162 = arith.select %134, %160, %161 : vector<1x128xf32>
    %c5_i32 = arith.constant 5 : i32
    %163 = arith.addi %10, %c5_i32 : i32
    %c8_i32_48 = arith.constant 8 : i32
    %164 = arith.cmpi slt, %163, %c8_i32_48 : i32
    %165 = vector.extract_strided_slice %12 {offsets = [5, 0], sizes = [1, 384], strides = [1, 1]} : vector<8x384xf32> to vector<1x384xf32>
    %166 = arith.truncf %160 : vector<1x128xf32> to vector<1x128xbf16>
    %c0_49 = arith.constant 0 : index
    %c0_50 = arith.constant 0 : index
    %167 = vector.load %arg3[%c0_49, %c0_50] : memref<128x384xbf16, #tpu.memory_space<vmem>>, vector<128x384xbf16>
    %cst_51 = arith.constant dense<0.000000e+00> : vector<1x384xf32>
    %168 = tpu.matmul %166, %167, %cst_51 {dimension_numbers = #tpu.dot_dimension_numbers<[1], [0], [0], [1], [0, 0, 1, 1], [], []>} : vector<1x128xbf16>, vector<128x384xbf16>, vector<1x384xf32> -> vector<1x384xf32>
    %169 = vector.extract_strided_slice %165 {offsets = [0, 0], sizes = [1, 256], strides = [1, 1]} : vector<1x384xf32> to vector<1x256xf32>
    %170 = vector.extract_strided_slice %168 {offsets = [0, 0], sizes = [1, 256], strides = [1, 1]} : vector<1x384xf32> to vector<1x256xf32>
    %171 = arith.addf %169, %170 : vector<1x256xf32>
    %172 = arith.negf %171 : vector<1x256xf32>
    %173 = math.exp %172 : vector<1x256xf32>
    %cst_52 = arith.constant 1.000000e+00 : f32
    %174 = vector.broadcast %cst_52 : f32 to vector<1x256xf32>
    %175 = arith.addf %174, %173 : vector<1x256xf32>
    %176 = arith.divf %174, %175 : vector<1x256xf32>
    %177 = vector.extract_strided_slice %176 {offsets = [0, 0], sizes = [1, 128], strides = [1, 1]} : vector<1x256xf32> to vector<1x128xf32>
    %178 = vector.extract_strided_slice %176 {offsets = [0, 128], sizes = [1, 128], strides = [1, 1]} : vector<1x256xf32> to vector<1x128xf32>
    %179 = vector.extract_strided_slice %165 {offsets = [0, 256], sizes = [1, 128], strides = [1, 1]} : vector<1x384xf32> to vector<1x128xf32>
    %180 = vector.extract_strided_slice %168 {offsets = [0, 256], sizes = [1, 128], strides = [1, 1]} : vector<1x384xf32> to vector<1x128xf32>
    %181 = arith.addf %180, %7 : vector<1x128xf32>
    %182 = arith.mulf %177, %181 : vector<1x128xf32>
    %183 = arith.addf %179, %182 : vector<1x128xf32>
    %184 = math.tanh %183 : vector<1x128xf32>
    %cst_53 = arith.constant 1.000000e+00 : f32
    %185 = vector.broadcast %cst_53 : f32 to vector<1x128xf32>
    %186 = arith.subf %185, %178 : vector<1x128xf32>
    %187 = arith.mulf %186, %184 : vector<1x128xf32>
    %188 = arith.mulf %178, %160 : vector<1x128xf32>
    %189 = arith.addf %187, %188 : vector<1x128xf32>
    %190 = arith.select %164, %189, %160 : vector<1x128xf32>
    %cst_54 = arith.constant 0.000000e+00 : f32
    %191 = vector.broadcast %cst_54 : f32 to vector<1x128xf32>
    %192 = arith.select %164, %190, %191 : vector<1x128xf32>
    %c6_i32 = arith.constant 6 : i32
    %193 = arith.addi %10, %c6_i32 : i32
    %c8_i32_55 = arith.constant 8 : i32
    %194 = arith.cmpi slt, %193, %c8_i32_55 : i32
    %195 = vector.extract_strided_slice %12 {offsets = [6, 0], sizes = [1, 384], strides = [1, 1]} : vector<8x384xf32> to vector<1x384xf32>
    %196 = arith.truncf %190 : vector<1x128xf32> to vector<1x128xbf16>
    %c0_56 = arith.constant 0 : index
    %c0_57 = arith.constant 0 : index
    %197 = vector.load %arg3[%c0_56, %c0_57] : memref<128x384xbf16, #tpu.memory_space<vmem>>, vector<128x384xbf16>
    %cst_58 = arith.constant dense<0.000000e+00> : vector<1x384xf32>
    %198 = tpu.matmul %196, %197, %cst_58 {dimension_numbers = #tpu.dot_dimension_numbers<[1], [0], [0], [1], [0, 0, 1, 1], [], []>} : vector<1x128xbf16>, vector<128x384xbf16>, vector<1x384xf32> -> vector<1x384xf32>
    %199 = vector.extract_strided_slice %195 {offsets = [0, 0], sizes = [1, 256], strides = [1, 1]} : vector<1x384xf32> to vector<1x256xf32>
    %200 = vector.extract_strided_slice %198 {offsets = [0, 0], sizes = [1, 256], strides = [1, 1]} : vector<1x384xf32> to vector<1x256xf32>
    %201 = arith.addf %199, %200 : vector<1x256xf32>
    %202 = arith.negf %201 : vector<1x256xf32>
    %203 = math.exp %202 : vector<1x256xf32>
    %cst_59 = arith.constant 1.000000e+00 : f32
    %204 = vector.broadcast %cst_59 : f32 to vector<1x256xf32>
    %205 = arith.addf %204, %203 : vector<1x256xf32>
    %206 = arith.divf %204, %205 : vector<1x256xf32>
    %207 = vector.extract_strided_slice %206 {offsets = [0, 0], sizes = [1, 128], strides = [1, 1]} : vector<1x256xf32> to vector<1x128xf32>
    %208 = vector.extract_strided_slice %206 {offsets = [0, 128], sizes = [1, 128], strides = [1, 1]} : vector<1x256xf32> to vector<1x128xf32>
    %209 = vector.extract_strided_slice %195 {offsets = [0, 256], sizes = [1, 128], strides = [1, 1]} : vector<1x384xf32> to vector<1x128xf32>
    %210 = vector.extract_strided_slice %198 {offsets = [0, 256], sizes = [1, 128], strides = [1, 1]} : vector<1x384xf32> to vector<1x128xf32>
    %211 = arith.addf %210, %7 : vector<1x128xf32>
    %212 = arith.mulf %207, %211 : vector<1x128xf32>
    %213 = arith.addf %209, %212 : vector<1x128xf32>
    %214 = math.tanh %213 : vector<1x128xf32>
    %cst_60 = arith.constant 1.000000e+00 : f32
    %215 = vector.broadcast %cst_60 : f32 to vector<1x128xf32>
    %216 = arith.subf %215, %208 : vector<1x128xf32>
    %217 = arith.mulf %216, %214 : vector<1x128xf32>
    %218 = arith.mulf %208, %190 : vector<1x128xf32>
    %219 = arith.addf %217, %218 : vector<1x128xf32>
    %220 = arith.select %194, %219, %190 : vector<1x128xf32>
    %cst_61 = arith.constant 0.000000e+00 : f32
    %221 = vector.broadcast %cst_61 : f32 to vector<1x128xf32>
    %222 = arith.select %194, %220, %221 : vector<1x128xf32>
    %c7_i32 = arith.constant 7 : i32
    %223 = arith.addi %10, %c7_i32 : i32
    %c8_i32_62 = arith.constant 8 : i32
    %224 = arith.cmpi slt, %223, %c8_i32_62 : i32
    %225 = vector.extract_strided_slice %12 {offsets = [7, 0], sizes = [1, 384], strides = [1, 1]} : vector<8x384xf32> to vector<1x384xf32>
    %226 = arith.truncf %220 : vector<1x128xf32> to vector<1x128xbf16>
    %c0_63 = arith.constant 0 : index
    %c0_64 = arith.constant 0 : index
    %227 = vector.load %arg3[%c0_63, %c0_64] : memref<128x384xbf16, #tpu.memory_space<vmem>>, vector<128x384xbf16>
    %cst_65 = arith.constant dense<0.000000e+00> : vector<1x384xf32>
    %228 = tpu.matmul %226, %227, %cst_65 {dimension_numbers = #tpu.dot_dimension_numbers<[1], [0], [0], [1], [0, 0, 1, 1], [], []>} : vector<1x128xbf16>, vector<128x384xbf16>, vector<1x384xf32> -> vector<1x384xf32>
    %229 = vector.extract_strided_slice %225 {offsets = [0, 0], sizes = [1, 256], strides = [1, 1]} : vector<1x384xf32> to vector<1x256xf32>
    %230 = vector.extract_strided_slice %228 {offsets = [0, 0], sizes = [1, 256], strides = [1, 1]} : vector<1x384xf32> to vector<1x256xf32>
    %231 = arith.addf %229, %230 : vector<1x256xf32>
    %232 = arith.negf %231 : vector<1x256xf32>
    %233 = math.exp %232 : vector<1x256xf32>
    %cst_66 = arith.constant 1.000000e+00 : f32
    %234 = vector.broadcast %cst_66 : f32 to vector<1x256xf32>
    %235 = arith.addf %234, %233 : vector<1x256xf32>
    %236 = arith.divf %234, %235 : vector<1x256xf32>
    %237 = vector.extract_strided_slice %236 {offsets = [0, 0], sizes = [1, 128], strides = [1, 1]} : vector<1x256xf32> to vector<1x128xf32>
    %238 = vector.extract_strided_slice %236 {offsets = [0, 128], sizes = [1, 128], strides = [1, 1]} : vector<1x256xf32> to vector<1x128xf32>
    %239 = vector.extract_strided_slice %225 {offsets = [0, 256], sizes = [1, 128], strides = [1, 1]} : vector<1x384xf32> to vector<1x128xf32>
    %240 = vector.extract_strided_slice %228 {offsets = [0, 256], sizes = [1, 128], strides = [1, 1]} : vector<1x384xf32> to vector<1x128xf32>
    %241 = arith.addf %240, %7 : vector<1x128xf32>
    %242 = arith.mulf %237, %241 : vector<1x128xf32>
    %243 = arith.addf %239, %242 : vector<1x128xf32>
    %244 = math.tanh %243 : vector<1x128xf32>
    %cst_67 = arith.constant 1.000000e+00 : f32
    %245 = vector.broadcast %cst_67 : f32 to vector<1x128xf32>
    %246 = arith.subf %245, %238 : vector<1x128xf32>
    %247 = arith.mulf %246, %244 : vector<1x128xf32>
    %248 = arith.mulf %238, %220 : vector<1x128xf32>
    %249 = arith.addf %247, %248 : vector<1x128xf32>
    %250 = arith.select %224, %249, %220 : vector<1x128xf32>
    %cst_68 = arith.constant 0.000000e+00 : f32
    %251 = vector.broadcast %cst_68 : f32 to vector<1x128xf32>
    %252 = arith.select %224, %250, %251 : vector<1x128xf32>
    %253 = tpu.concatenate %42, %72, %102, %132, %162, %192, %222, %252 in 0 : vector<1x128xf32>, vector<1x128xf32>, vector<1x128xf32>, vector<1x128xf32>, vector<1x128xf32>, vector<1x128xf32>, vector<1x128xf32>, vector<1x128xf32> -> vector<8x128xf32>
    %254 = arith.index_cast %10 : i32 to index
    %c0_69 = arith.constant 0 : index
    %255 = vector.load %arg6[%254, %c0_69] : memref<8x128xf32, #tpu.memory_space<vmem>>, vector<8x128xf32>
    tpu.vector_store %arg6[%254, %c0_69], %253 {strides = array<i32>} : memref<8x128xf32, #tpu.memory_space<vmem>>, vector<8x128xf32>,
    %c1_i32_70 = arith.constant 1 : i32
    %c0_71 = arith.constant 0 : index
    %c0_72 = arith.constant 0 : index
    %256 = vector.load %arg7[%c0_71, %c0_72] : memref<1x128xf32, #tpu.memory_space<vmem>>, vector<1x128xf32>
    tpu.vector_store %arg7[%c0_71, %c0_72], %250 {strides = array<i32>} : memref<1x128xf32, #tpu.memory_space<vmem>>, vector<1x128xf32>,
    return
  }
}

</mosaic_0001>

<llo_original>
// kernel: encoder_rnn_forward.1
$region0: #{encoder_rnn_forward.1}
  #allocation0 [shape = 'u32[]', space=smem, size = 0x4, offset = 0x4, fixed_abs, tag = 'smem constant byte address 0x4 - core index']
  #allocation1 [shape = 'u32[144,128]{1,0:T(1,128)}', space=vmem, size = 0x12000, scoped, tag = 'internal scratch']
  #allocation2 [shape = 'f32[8,384]{1,0:T(8,128)}', space=vmem, size = 0x3000, scoped, tag = 'scratch operand']
  %s0 = inlined_call_operand.vmem [shape: bf16[8,128], index: 0, kind: input, shape index: {}]
  %s1 = inlined_call_operand.vmem [shape: f32[1,128], index: 1, kind: input, shape index: {}]
  %s2 = inlined_call_operand.hbm [shape: bf16[128,384], index: 2, kind: input, shape index: {}]
  %s3 = inlined_call_operand.hbm [shape: bf16[128,384], index: 3, kind: input, shape index: {}]
  %s4 = inlined_call_operand.vmem [shape: f32[1,384], index: 4, kind: input, shape index: {}]
  %s5 = inlined_call_operand.vmem [shape: f32[1,128], index: 5, kind: input, shape index: {}]
  %s6 = inlined_call_operand.hbm [shape: f32[8,128], index: 6, kind: output, shape index: {0}]
  %s7 = inlined_call_operand.vmem [shape: f32[1,128], index: 7, kind: output, shape index: {1}]
  %8 = xla_tuple %s6, %s7
  %s9 = sld [smem:[#allocation0]]
  $region50: #{encoder_rnn_forward.1} parent=0
    _
  %s11 = ssub.s32 1, %s9
  %s12 = scalar_select 0, %s11, %s9
  $region1: #{encoder_rnn_forward.1} parent=0
    #allocation3 [shape = 'u8[98304]{0}', space=vmem, size = 0x18000, scoped, tag = 'input window, operand 2, single buffered']
    #allocation4 [shape = 's32[1]{0}', space=sflag, size = 0x4, scoped, tag = 'scoped memory for encoder_rnn_forward.1']
    #allocation5 [shape = 's32[1]{0}', space=sflag, size = 0x4, scoped, tag = 'scoped memory for encoder_rnn_forward.1']
    #allocation6 [shape = 'u8[98304]{0}', space=vmem, size = 0x18000, scoped, tag = 'input window, operand 3, single buffered']
    #allocation7 [shape = 's32[1]{0}', space=sflag, size = 0x4, scoped, tag = 'scoped memory for encoder_rnn_forward.1']
    #allocation8 [shape = 'u8[4096]{0}', space=vmem, size = 0x1000, scoped, tag = 'output window, operand 0, single buffered']
    %13 = vsyncpa [#allocation4], 0
    %14 = vsyncpa [#allocation7], 0
    %15 = vsyncpa [#allocation5], 0
    // Predicated region
    $region2: #{encoder_rnn_forward.1} parent=1 // pred_check
      _
    $region3: #{encoder_rnn_forward.1} parent=1 // pred_check_branch
      %17 = sbr.rel (0) target = $region5
    $region4: #{encoder_rnn_forward.1} parent=1 // pred_region
      _
    $region5: #{encoder_rnn_forward.1} parent=1 // pred_fallthru
      _
    // Predicated region
    $region6: #{encoder_rnn_forward.1} parent=1 // pred_check
      _
    $region7: #{encoder_rnn_forward.1} parent=1 // pred_check_branch
      %19 = sbr.rel (0) target = $region9
    $region8: #{encoder_rnn_forward.1} parent=1 // pred_region
      _
    $region9: #{encoder_rnn_forward.1} parent=1 // pred_fallthru
      _
    // Predicated region
    $region10: #{encoder_rnn_forward.1} parent=1 // pred_check
      _
    $region11: #{encoder_rnn_forward.1} parent=1 // pred_check_branch
      %21 = sbr.rel (0) target = $region13
    $region12: #{encoder_rnn_forward.1} parent=1 // pred_region
      %s23 = ssub.s32 3072, 3072
      %24 = vsyncadd [#allocation4], %s23
      %s25 = sshll.u32 [#allocation3], 4
      %s26 = int_to_ptr.vmem [resolvable:$true] %s25
      %31 = dma.hbm_to_vmem [thread:$0]  %s2, 3072, %s26, [#allocation4], 192, 192, 12
    $region13: #{encoder_rnn_forward.1} parent=1 // pred_fallthru
      _
    // Predicated region
    $region14: #{encoder_rnn_forward.1} parent=1 // pred_check
      _
    $region15: #{encoder_rnn_forward.1} parent=1 // pred_check_branch
      %33 = sbr.rel (0) target = $region17
    $region16: #{encoder_rnn_forward.1} parent=1 // pred_region
      %s35 = ssub.s32 3072, 3072
      %36 = vsyncadd [#allocation7], %s35
      %s37 = sshll.u32 [#allocation6], 4
      %s38 = int_to_ptr.vmem [resolvable:$true] %s37
      %43 = dma.hbm_to_vmem [thread:$0]  %s3, 3072, %s38, [#allocation7], 192, 192, 12
    $region17: #{encoder_rnn_forward.1} parent=1 // pred_fallthru
      _
    // Predicated region
    $region18: #{encoder_rnn_forward.1} parent=1 // pred_check
      _
    $region19: #{encoder_rnn_forward.1} parent=1 // pred_check_branch
      %45 = sbr.rel (0) target = $region21
    $region20: #{encoder_rnn_forward.1} parent=1 // pred_region
      _
    $region21: #{encoder_rnn_forward.1} parent=1 // pred_fallthru
      _
    // Predicated region
    $region22: #{encoder_rnn_forward.1} parent=1 // pred_check
      _
    $region23: #{encoder_rnn_forward.1} parent=1 // pred_check_branch
      %47 = sbr.rel (0) target = $region25
    $region24: #{encoder_rnn_forward.1} parent=1 // pred_region
      _
    $region25: #{encoder_rnn_forward.1} parent=1 // pred_fallthru
      _
    // Predicated region
    $region26: #{encoder_rnn_forward.1} parent=1 // pred_check
      _
    $region27: #{encoder_rnn_forward.1} parent=1 // pred_check_branch
      %49 = sbr.rel (0) target = $region29
    $region28: #{encoder_rnn_forward.1} parent=1 // pred_region
      %50 = dma.done [#allocation4], 3072
    $region29: #{encoder_rnn_forward.1} parent=1 // pred_fallthru
      _
    // Predicated region
    $region30: #{encoder_rnn_forward.1} parent=1 // pred_check
      _
    $region31: #{encoder_rnn_forward.1} parent=1 // pred_check_branch
      %52 = sbr.rel (0) target = $region33
    $region32: #{encoder_rnn_forward.1} parent=1 // pred_region
      %53 = dma.done [#allocation7], 3072
    $region33: #{encoder_rnn_forward.1} parent=1 // pred_fallthru
      _
    %v55 = vld [vmem:[%s0] sm:$0xf]
    %v56 = vld [vmem:[#allocation3] sm:$0xff]
    %v57 = vld [vmem:[#allocation3 + $0x8] sm:$0xf]
    %v58 = vld [vmem:[#allocation3 + $0xc] sm:$0xff]
    %v59 = vld [vmem:[#allocation3 + $0x14] sm:$0xf]
    %v60 = vld [vmem:[#allocation3 + $0x18] sm:$0xff]
    %v61 = vld [vmem:[#allocation3 + $0x20] sm:$0xf]
    %v62 = vld [vmem:[#allocation3 + $0x24] sm:$0xff]
    %v63 = vld [vmem:[#allocation3 + $0x2c] sm:$0xf]
    %v64 = vld [vmem:[#allocation3 + $0x30] sm:$0xff]
    %v65 = vld [vmem:[#allocation3 + $0x38] sm:$0xf]
    %v66 = vld [vmem:[#allocation3 + $0x3c] sm:$0xff]
    %v67 = vld [vmem:[#allocation3 + $0x44] sm:$0xf]
    %v68 = vld [vmem:[#allocation3 + $0x48] sm:$0xff]
    %v69 = vld [vmem:[#allocation3 + $0x50] sm:$0xf]
    %v70 = vld [vmem:[#allocation3 + $0x54] sm:$0xff]
    %v71 = vld [vmem:[#allocation3 + $0x5c] sm:$0xf]
    %v72 = vld [vmem:[#allocation3 + $0x60] sm:$0xff]
    %v73 = vld [vmem:[#allocation3 + $0x68] sm:$0xf]
    %v74 = vld [vmem:[#allocation3 + $0x6c] sm:$0xff]
    %v75 = vld [vmem:[#allocation3 + $0x74] sm:$0xf]
    %v76 = vld [vmem:[#allocation3 + $0x78] sm:$0xff]
    %v77 = vld [vmem:[#allocation3 + $0x80] sm:$0xf]
    %v78 = vld [vmem:[#allocation3 + $0x84] sm:$0xff]
    %v79 = vld [vmem:[#allocation3 + $0x8c] sm:$0xf]
    %v80 = vld [vmem:[#allocation3 + $0x90] sm:$0xff]
    %v81 = vld [vmem:[#allocation3 + $0x98] sm:$0xf]
    %v82 = vld [vmem:[#allocation3 + $0x9c] sm:$0xff]
    %v83 = vld [vmem:[#allocation3 + $0xa4] sm:$0xf]
    %v84 = vld [vmem:[#allocation3 + $0xa8] sm:$0xff]
    %v85 = vld [vmem:[#allocation3 + $0xb0] sm:$0xf]
    %v86 = vld [vmem:[#allocation3 + $0xb4] sm:$0xff]
    %v87 = vld [vmem:[#allocation3 + $0xbc] sm:$0xf]
    %v88 = vld [vmem:[%s4] sm:$0x7]
    %v90 = vlaneseq
    %v91 = vshrl.u32 %v90, 7
    %v92 = vsub.s32 0, %v91
    %v93 = vrot.slane %v88, %v92
    %v94 = vlaneseq
    %v95 = vshrl.u32 %v94, 7
    %v96 = vsub.s32 1, %v95
    %v97 = vrot.slane %v88, %v96
    %v98 = vlaneseq
    %v99 = vshrl.u32 %v98, 7
    %v100 = vsub.s32 2, %v99
    %v101 = vrot.slane %v88, %v100
    %v137 = vunpack.c.l.b16 %v56
    %v138 = vunpack.c.h.b16 %v56
    %v139 = vunpack.c.l.b16 %v57
    %v140 = vunpack.c.l.b16 %v58
    %v141 = vunpack.c.h.b16 %v58
    %v142 = vunpack.c.l.b16 %v59
    %v143 = vunpack.c.l.b16 %v60
    %v144 = vunpack.c.h.b16 %v60
    %v145 = vunpack.c.l.b16 %v61
    %v146 = vunpack.c.l.b16 %v62
    %v147 = vunpack.c.h.b16 %v62
    %v148 = vunpack.c.l.b16 %v63
    %v149 = vunpack.c.l.b16 %v64
    %v150 = vunpack.c.h.b16 %v64
    %v151 = vunpack.c.l.b16 %v65
    %v152 = vunpack.c.l.b16 %v66
    %v153 = vunpack.c.h.b16 %v66
    %v154 = vunpack.c.l.b16 %v67
    %v155 = vunpack.c.l.b16 %v68
    %v156 = vunpack.c.h.b16 %v68
    %v157 = vunpack.c.l.b16 %v69
    %v158 = vunpack.c.l.b16 %v70
    %v159 = vunpack.c.h.b16 %v70
    %v160 = vunpack.c.l.b16 %v71
    %v161 = vunpack.c.l.b16 %v72
    %v162 = vunpack.c.h.b16 %v72
    %v163 = vunpack.c.l.b16 %v73
    %v164 = vunpack.c.l.b16 %v74
    %v165 = vunpack.c.h.b16 %v74
    %v166 = vunpack.c.l.b16 %v75
    %v167 = vunpack.c.l.b16 %v76
    %v168 = vunpack.c.h.b16 %v76
    %v169 = vunpack.c.l.b16 %v77
    %v170 = vunpack.c.l.b16 %v78
    %v171 = vunpack.c.h.b16 %v78
    %v172 = vunpack.c.l.b16 %v79
    %v173 = vunpack.c.l.b16 %v80
    %v174 = vunpack.c.h.b16 %v80
    %v175 = vunpack.c.l.b16 %v81
    %v176 = vunpack.c.l.b16 %v82
    %v177 = vunpack.c.h.b16 %v82
    %v178 = vunpack.c.l.b16 %v83
    %v179 = vunpack.c.l.b16 %v84
    %v180 = vunpack.c.h.b16 %v84
    %v181 = vunpack.c.l.b16 %v85
    %v182 = vunpack.c.l.b16 %v86
    %v183 = vunpack.c.h.b16 %v86
    %v184 = vunpack.c.l.b16 %v87
    %v185 = vpack.c.b16 %v140, %v137
    %v186 = vpack.c.b16 %v141, %v138
    %v187 = vpack.c.b16 %v142, %v139
    %v188 = vpack.c.b16 %v146, %v143
    %v189 = vpack.c.b16 %v147, %v144
    %v190 = vpack.c.b16 %v148, %v145
    %v191 = vpack.c.b16 %v152, %v149
    %v192 = vpack.c.b16 %v153, %v150
    %v193 = vpack.c.b16 %v154, %v151
    %v194 = vpack.c.b16 %v158, %v155
    %v195 = vpack.c.b16 %v159, %v156
    %v196 = vpack.c.b16 %v160, %v157
    %v197 = vpack.c.b16 %v164, %v161
    %v198 = vpack.c.b16 %v165, %v162
    %v199 = vpack.c.b16 %v166, %v163
    %v200 = vpack.c.b16 %v170, %v167
    %v201 = vpack.c.b16 %v171, %v168
    %v202 = vpack.c.b16 %v172, %v169
    %v203 = vpack.c.b16 %v176, %v173
    %v204 = vpack.c.b16 %v177, %v174
    %v205 = vpack.c.b16 %v178, %v175
    %v206 = vpack.c.b16 %v182, %v179
    %v207 = vpack.c.b16 %v183, %v180
    %v208 = vpack.c.b16 %v184, %v181
    %233 = vmatprep.subr.bf16.mxu0 %v186
    %234 = vmatpush1.bf16.msra.mxu0 %v185
    %235 = vmatprep.subr.bf16.mxu0 %v189
    %236 = vmatpush1.bf16.msra.mxu0 %v188
    %237 = vmatprep.subr.bf16.mxu0 %v192
    %238 = vmatpush1.bf16.msra.mxu0 %v191
    %239 = vmatprep.subr.bf16.mxu0 %v195
    %240 = vmatpush1.bf16.msra.mxu0 %v194
    %241 = vmatprep.subr.bf16.mxu0 %v198
    %242 = vmatpush1.bf16.msra.mxu0 %v197
    %243 = vmatprep.subr.bf16.mxu0 %v201
    %244 = vmatpush1.bf16.msra.mxu0 %v200
    %245 = vmatprep.subr.bf16.mxu0 %v204
    %246 = vmatpush1.bf16.msra.mxu0 %v203
    %247 = vmatprep.subr.bf16.mxu0 %v207
    %248 = vmatpush1.bf16.msra.mxu0 %v206
    %249 = vmatprep.subr.bf16.mxu0 0
    %250 = vmatpush1.bf16.msra.mxu0 0
    %251 = vmatprep.subr.bf16.mxu0 0
    %252 = vmatpush1.bf16.msra.mxu0 0
    %253 = vmatprep.subr.bf16.mxu0 0
    %254 = vmatpush1.bf16.msra.mxu0 0
    %255 = vmatprep.subr.bf16.mxu0 0
    %256 = vmatpush1.bf16.msra.mxu0 0
    %257 = vmatprep.subr.bf16.mxu0 0
    %258 = vmatpush1.bf16.msra.mxu0 0
    %259 = vmatprep.subr.bf16.mxu0 0
    %260 = vmatpush1.bf16.msra.mxu0 0
    %261 = vmatprep.subr.bf16.mxu0 0
    %262 = vmatpush1.bf16.msra.mxu0 0
    %263 = vmatprep.subr.bf16.mxu0 0
    %264 = vmatpush1.bf16.msra.mxu0 0
    %265 = vmatprep.mubr.bf16.mxu0 0
    %266 = vmatmul.mubr.bf16.gmra.mrb[0].mxu0 %v55
    %v267 = vpop.f32.mrb[0].mxu0
    %v268 = vadd.f32 %v93, %v267
    %v269 = vpop.f32.mrb[0].mxu0
    %v270 = vadd.f32 %v97, %v269
    %v271 = vpop.f32.mrb[0].mxu0
    %v272 = vpop.f32.mrb[0].mxu0
    %273 = vdwg.mxu0
    %274 = vmatprep.subr.bf16.mxu0 0
    %275 = vmatpush1.bf16.msra.mxu0 %v187
    %276 = vmatprep.subr.bf16.mxu0 0
    %277 = vmatpush1.bf16.msra.mxu0 %v190
    %278 = vmatprep.subr.bf16.mxu0 0
    %279 = vmatpush1.bf16.msra.mxu0 %v193
    %280 = vmatprep.subr.bf16.mxu0 0
    %281 = vmatpush1.bf16.msra.mxu0 %v196
    %282 = vmatprep.subr.bf16.mxu0 0
    %283 = vmatpush1.bf16.msra.mxu0 %v199
    %284 = vmatprep.subr.bf16.mxu0 0
    %285 = vmatpush1.bf16.msra.mxu0 %v202
    %286 = vmatprep.subr.bf16.mxu0 0
    %287 = vmatpush1.bf16.msra.mxu0 %v205
    %288 = vmatprep.subr.bf16.mxu0 0
    %289 = vmatpush1.bf16.msra.mxu0 %v208
    %290 = vmatprep.subr.bf16.mxu0 0
    %291 = vmatpush1.bf16.msra.mxu0 0
    %292 = vmatprep.subr.bf16.mxu0 0
    %293 = vmatpush1.bf16.msra.mxu0 0
    %294 = vmatprep.subr.bf16.mxu0 0
    %295 = vmatpush1.bf16.msra.mxu0 0
    %296 = vmatprep.subr.bf16.mxu0 0
    %297 = vmatpush1.bf16.msra.mxu0 0
    %298 = vmatprep.subr.bf16.mxu0 0
    %299 = vmatpush1.bf16.msra.mxu0 0
    %300 = vmatprep.subr.bf16.mxu0 0
    %301 = vmatpush1.bf16.msra.mxu0 0
    %302 = vmatprep.subr.bf16.mxu0 0
    %303 = vmatpush1.bf16.msra.mxu0 0
    %304 = vmatprep.subr.bf16.mxu0 0
    %305 = vmatpush1.bf16.msra.mxu0 0
    %306 = vmatprep.mubr.bf16.mxu0 0
    %307 = vmatmul.mubr.bf16.gmra.mrb[0].mxu0 %v55
    %v308 = vpop.f32.mrb[0].mxu0
    %v309 = vadd.f32 %v101, %v308
    %v310 = vpop.f32.mrb[0].mxu0
    %v311 = vpop.f32.mrb[0].mxu0
    %v312 = vpop.f32.mrb[0].mxu0
    %313 = vdwg.mxu0
    %314 = vst [vmem:[#allocation2] sm:$0xff] %v268
    %315 = vst [vmem:[#allocation2 + $0x8] sm:$0xff] %v270
    %316 = vst [vmem:[#allocation2 + $0x10] sm:$0xff] %v309
    %v317 = vld [vmem:[%s5] sm:$0x1]
    %v318 = vld [vmem:[%s1] sm:$0x1]
    %s319 = smul.u32 0, 3
    %s320 = smul.addr %s319, 8
    %s321 = scalar_lea.vmem [#allocation2], %s320
    %v322 = vld [vmem:[%s321] sm:$0xff]
    %v323 = vld [vmem:[%s321 + $0x8] sm:$0xff]
    %v324 = vld [vmem:[%s321 + $0x10] sm:$0xff]
    %p325 = scmp.lt.s32.totalorder 0, 8
    %v326 = vpack.c.bf16 %v318, %v318
    %v327 = vld [vmem:[#allocation6] sm:$0xff]
    %v328 = vld [vmem:[#allocation6 + $0x8] sm:$0xf]
    %v329 = vld [vmem:[#allocation6 + $0xc] sm:$0xff]
    %v330 = vld [vmem:[#allocation6 + $0x14] sm:$0xf]
    %v331 = vld [vmem:[#allocation6 + $0x18] sm:$0xff]
    %v332 = vld [vmem:[#allocation6 + $0x20] sm:$0xf]
    %v333 = vld [vmem:[#allocation6 + $0x24] sm:$0xff]
    %v334 = vld [vmem:[#allocation6 + $0x2c] sm:$0xf]
    %v335 = vld [vmem:[#allocation6 + $0x30] sm:$0xff]
    %v336 = vld [vmem:[#allocation6 + $0x38] sm:$0xf]
    %v337 = vld [vmem:[#allocation6 + $0x3c] sm:$0xff]
    %v338 = vld [vmem:[#allocation6 + $0x44] sm:$0xf]
    %v339 = vld [vmem:[#allocation6 + $0x48] sm:$0xff]
    %v340 = vld [vmem:[#allocation6 + $0x50] sm:$0xf]
    %v341 = vld [vmem:[#allocation6 + $0x54] sm:$0xff]
    %v342 = vld [vmem:[#allocation6 + $0x5c] sm:$0xf]
    %v343 = vld [vmem:[#allocation6 + $0x60] sm:$0xff]
    %v344 = vld [vmem:[#allocation6 + $0x68] sm:$0xf]
    %v345 = vld [vmem:[#allocation6 + $0x6c] sm:$0xff]
    %v346 = vld [vmem:[#allocation6 + $0x74] sm:$0xf]
    %v347 = vld [vmem:[#allocation6 + $0x78] sm:$0xff]
    %v348 = vld [vmem:[#allocation6 + $0x80] sm:$0xf]
    %v349 = vld [vmem:[#allocation6 + $0x84] sm:$0xff]
    %v350 = vld [vmem:[#allocation6 + $0x8c] sm:$0xf]
    %v351 = vld [vmem:[#allocation6 + $0x90] sm:$0xff]
    %v352 = vld [vmem:[#allocation6 + $0x98] sm:$0xf]
    %v353 = vld [vmem:[#allocation6 + $0x9c] sm:$0xff]
    %v354 = vld [vmem:[#allocation6 + $0xa4] sm:$0xf]
    %v355 = vld [vmem:[#allocation6 + $0xa8] sm:$0xff]
    %v356 = vld [vmem:[#allocation6 + $0xb0] sm:$0xf]
    %v357 = vld [vmem:[#allocation6 + $0xb4] sm:$0xff]
    %v358 = vld [vmem:[#allocation6 + $0xbc] sm:$0xf]
    %v391 = vunpack.c.l.b16 %v327
    %v392 = vunpack.c.h.b16 %v327
    %v393 = vunpack.c.l.b16 %v328
    %v394 = vunpack.c.l.b16 %v329
    %v395 = vunpack.c.h.b16 %v329
    %v396 = vunpack.c.l.b16 %v330
    %v397 = vunpack.c.l.b16 %v331
    %v398 = vunpack.c.h.b16 %v331
    %v399 = vunpack.c.l.b16 %v332
    %v400 = vunpack.c.l.b16 %v333
    %v401 = vunpack.c.h.b16 %v333
    %v402 = vunpack.c.l.b16 %v334
    %v403 = vunpack.c.l.b16 %v335
    %v404 = vunpack.c.h.b16 %v335
    %v405 = vunpack.c.l.b16 %v336
    %v406 = vunpack.c.l.b16 %v337
    %v407 = vunpack.c.h.b16 %v337
    %v408 = vunpack.c.l.b16 %v338
    %v409 = vunpack.c.l.b16 %v339
    %v410 = vunpack.c.h.b16 %v339
    %v411 = vunpack.c.l.b16 %v340
    %v412 = vunpack.c.l.b16 %v341
    %v413 = vunpack.c.h.b16 %v341
    %v414 = vunpack.c.l.b16 %v342
    %v415 = vunpack.c.l.b16 %v343
    %v416 = vunpack.c.h.b16 %v343
    %v417 = vunpack.c.l.b16 %v344
    %v418 = vunpack.c.l.b16 %v345
    %v419 = vunpack.c.h.b16 %v345
    %v420 = vunpack.c.l.b16 %v346
    %v421 = vunpack.c.l.b16 %v347
    %v422 = vunpack.c.h.b16 %v347
    %v423 = vunpack.c.l.b16 %v348
    %v424 = vunpack.c.l.b16 %v349
    %v425 = vunpack.c.h.b16 %v349
    %v426 = vunpack.c.l.b16 %v350
    %v427 = vunpack.c.l.b16 %v351
    %v428 = vunpack.c.h.b16 %v351
    %v429 = vunpack.c.l.b16 %v352
    %v430 = vunpack.c.l.b16 %v353
    %v431 = vunpack.c.h.b16 %v353
    %v432 = vunpack.c.l.b16 %v354
    %v433 = vunpack.c.l.b16 %v355
    %v434 = vunpack.c.h.b16 %v355
    %v435 = vunpack.c.l.b16 %v356
    %v436 = vunpack.c.l.b16 %v357
    %v437 = vunpack.c.h.b16 %v357
    %v438 = vunpack.c.l.b16 %v358
    %v439 = vpack.c.b16 %v394, %v391
    %v440 = vpack.c.b16 %v395, %v392
    %v441 = vpack.c.b16 %v396, %v393
    %v442 = vpack.c.b16 %v400, %v397
    %v443 = vpack.c.b16 %v401, %v398
    %v444 = vpack.c.b16 %v402, %v399
    %v445 = vpack.c.b16 %v406, %v403
    %v446 = vpack.c.b16 %v407, %v404
    %v447 = vpack.c.b16 %v408, %v405
    %v448 = vpack.c.b16 %v412, %v409
    %v449 = vpack.c.b16 %v413, %v410
    %v450 = vpack.c.b16 %v414, %v411
    %v451 = vpack.c.b16 %v418, %v415
    %v452 = vpack.c.b16 %v419, %v416
    %v453 = vpack.c.b16 %v420, %v417
    %v454 = vpack.c.b16 %v424, %v421
    %v455 = vpack.c.b16 %v425, %v422
    %v456 = vpack.c.b16 %v426, %v423
    %v457 = vpack.c.b16 %v430, %v427
    %v458 = vpack.c.b16 %v431, %v428
    %v459 = vpack.c.b16 %v432, %v429
    %v460 = vpack.c.b16 %v436, %v433
    %v461 = vpack.c.b16 %v437, %v434
    %v462 = vpack.c.b16 %v438, %v435
    %487 = vmatprep.subr.bf16.mxu0 %v440
    %488 = vmatpush1.bf16.msra.mxu0 %v439
    %489 = vmatprep.subr.bf16.mxu0 %v443
    %490 = vmatpush1.bf16.msra.mxu0 %v442
    %491 = vmatprep.subr.bf16.mxu0 %v446
    %492 = vmatpush1.bf16.msra.mxu0 %v445
    %493 = vmatprep.subr.bf16.mxu0 %v449
    %494 = vmatpush1.bf16.msra.mxu0 %v448
    %495 = vmatprep.subr.bf16.mxu0 %v452
    %496 = vmatpush1.bf16.msra.mxu0 %v451
    %497 = vmatprep.subr.bf16.mxu0 %v455
    %498 = vmatpush1.bf16.msra.mxu0 %v454
    %499 = vmatprep.subr.bf16.mxu0 %v458
    %500 = vmatpush1.bf16.msra.mxu0 %v457
    %501 = vmatprep.subr.bf16.mxu0 %v461
    %502 = vmatpush1.bf16.msra.mxu0 %v460
    %503 = vmatprep.subr.bf16.mxu0 0
    %504 = vmatpush1.bf16.msra.mxu0 0
    %505 = vmatprep.subr.bf16.mxu0 0
    %506 = vmatpush1.bf16.msra.mxu0 0
    %507 = vmatprep.subr.bf16.mxu0 0
    %508 = vmatpush1.bf16.msra.mxu0 0
    %509 = vmatprep.subr.bf16.mxu0 0
    %510 = vmatpush1.bf16.msra.mxu0 0
    %511 = vmatprep.subr.bf16.mxu0 0
    %512 = vmatpush1.bf16.msra.mxu0 0
    %513 = vmatprep.subr.bf16.mxu0 0
    %514 = vmatpush1.bf16.msra.mxu0 0
    %515 = vmatprep.subr.bf16.mxu0 0
    %516 = vmatpush1.bf16.msra.mxu0 0
    %517 = vmatprep.subr.bf16.mxu0 0
    %518 = vmatpush1.bf16.msra.mxu0 0
    %519 = vmatprep.mubr.bf16.mxu0 0
    %520 = vmatmul.mubr.bf16.gmra.mrb[0].mxu0 %v326
    %v521 = vpop.f32.mrb[0].mxu0
    %v522 = vadd.f32 0.0, %v521
    %v523 = vpop.f32.mrb[0].mxu0
    %v524 = vadd.f32 0.0, %v523
    %v525 = vpop.f32.mrb[0].mxu0
    %v526 = vpop.f32.mrb[0].mxu0
    %527 = vdwg.mxu0
    %528 = vmatprep.subr.bf16.mxu0 0
    %529 = vmatpush1.bf16.msra.mxu0 %v441
    %530 = vmatprep.subr.bf16.mxu0 0
    %531 = vmatpush1.bf16.msra.mxu0 %v444
    %532 = vmatprep.subr.bf16.mxu0 0
    %533 = vmatpush1.bf16.msra.mxu0 %v447
    %534 = vmatprep.subr.bf16.mxu0 0
    %535 = vmatpush1.bf16.msra.mxu0 %v450
    %536 = vmatprep.subr.bf16.mxu0 0
    %537 = vmatpush1.bf16.msra.mxu0 %v453
    %538 = vmatprep.subr.bf16.mxu0 0
    %539 = vmatpush1.bf16.msra.mxu0 %v456
    %540 = vmatprep.subr.bf16.mxu0 0
    %541 = vmatpush1.bf16.msra.mxu0 %v459
    %542 = vmatprep.subr.bf16.mxu0 0
    %543 = vmatpush1.bf16.msra.mxu0 %v462
    %544 = vmatprep.subr.bf16.mxu0 0
    %545 = vmatpush1.bf16.msra.mxu0 0
    %546 = vmatprep.subr.bf16.mxu0 0
    %547 = vmatpush1.bf16.msra.mxu0 0
    %548 = vmatprep.subr.bf16.mxu0 0
    %549 = vmatpush1.bf16.msra.mxu0 0
    %550 = vmatprep.subr.bf16.mxu0 0
    %551 = vmatpush1.bf16.msra.mxu0 0
    %552 = vmatprep.subr.bf16.mxu0 0
    %553 = vmatpush1.bf16.msra.mxu0 0
    %554 = vmatprep.subr.bf16.mxu0 0
    %555 = vmatpush1.bf16.msra.mxu0 0
    %556 = vmatprep.subr.bf16.mxu0 0
    %557 = vmatpush1.bf16.msra.mxu0 0
    %558 = vmatprep.subr.bf16.mxu0 0
    %559 = vmatpush1.bf16.msra.mxu0 0
    %560 = vmatprep.mubr.bf16.mxu0 0
    %561 = vmatmul.mubr.bf16.gmra.mrb[0].mxu0 %v326
    %v562 = vpop.f32.mrb[0].mxu0
    %v563 = vadd.f32 0.0, %v562
    %v564 = vpop.f32.mrb[0].mxu0
    %v565 = vpop.f32.mrb[0].mxu0
    %v566 = vpop.f32.mrb[0].mxu0
    %567 = vdwg.mxu0
    %v568 = vadd.f32 %v322, %v522
    %v569 = vadd.f32 %v323, %v524
    %v570 = vxor.u32 %v568, 2147483648
    %v571 = vxor.u32 %v569, 2147483648
    %v572 = vmul.f32 %v570, 1.442695
    %v573 = vpow.pop %v572
    %v574 = vmul.f32 %v571, 1.442695
    %v575 = vpow.pop %v574
    %v576 = vadd.f32 %v573, 1.0
    %v577 = vadd.f32 %v575, 1.0
    %v578 = vrcp.pop %v576
    %v579 = vmul.f32 1.0, %v578
    %v580 = vrcp.pop %v577
    %v581 = vmul.f32 1.0, %v580
    %v582 = vadd.f32 %v563, %v317
    %v583 = vmul.f32 %v579, %v582
    %v584 = vadd.f32 %v324, %v583
    %v585 = vtanh.pop %v584
    %v586 = vsub.f32 1.0, %v581
    %v587 = vmul.f32 %v586, %v585
    %v588 = vmul.f32 %v581, %v318
    %v589 = vadd.f32 %v587, %v588
    %s590 = scalar_select %p325, 1, 0
    %v591 = vstv %s590
    %vm592 = vcmp.eq.s32.totalorder %v591, 1
    %v593 = vsel %vm592, %v589, %v318
    %v594 = vsel %vm592, %v589, 0.0
    %s595 = sadd.s32 0, 1
    %p596 = scmp.lt.s32.totalorder %s595, 8
    %v597 = vpack.c.bf16 %v593, %v593
    %598 = vmatprep.subr.bf16.mxu0 %v440
    %599 = vmatpush1.bf16.msra.mxu0 %v439
    %600 = vmatprep.subr.bf16.mxu0 %v443
    %601 = vmatpush1.bf16.msra.mxu0 %v442
    %602 = vmatprep.subr.bf16.mxu0 %v446
    %603 = vmatpush1.bf16.msra.mxu0 %v445
    %604 = vmatprep.subr.bf16.mxu0 %v449
    %605 = vmatpush1.bf16.msra.mxu0 %v448
    %606 = vmatprep.subr.bf16.mxu0 %v452
    %607 = vmatpush1.bf16.msra.mxu0 %v451
    %608 = vmatprep.subr.bf16.mxu0 %v455
    %609 = vmatpush1.bf16.msra.mxu0 %v454
    %610 = vmatprep.subr.bf16.mxu0 %v458
    %611 = vmatpush1.bf16.msra.mxu0 %v457
    %612 = vmatprep.subr.bf16.mxu0 %v461
    %613 = vmatpush1.bf16.msra.mxu0 %v460
    %614 = vmatprep.subr.bf16.mxu0 0
    %615 = vmatpush1.bf16.msra.mxu0 0
    %616 = vmatprep.subr.bf16.mxu0 0
    %617 = vmatpush1.bf16.msra.mxu0 0
    %618 = vmatprep.subr.bf16.mxu0 0
    %619 = vmatpush1.bf16.msra.mxu0 0
    %620 = vmatprep.subr.bf16.mxu0 0
    %621 = vmatpush1.bf16.msra.mxu0 0
    %622 = vmatprep.subr.bf16.mxu0 0
    %623 = vmatpush1.bf16.msra.mxu0 0
    %624 = vmatprep.subr.bf16.mxu0 0
    %625 = vmatpush1.bf16.msra.mxu0 0
    %626 = vmatprep.subr.bf16.mxu0 0
    %627 = vmatpush1.bf16.msra.mxu0 0
    %628 = vmatprep.subr.bf16.mxu0 0
    %629 = vmatpush1.bf16.msra.mxu0 0
    %630 = vmatprep.mubr.bf16.mxu0 0
    %631 = vmatmul.mubr.bf16.gmra.mrb[0].mxu0 %v597
    %v632 = vpop.f32.mrb[0].mxu0
    %v633 = vadd.f32 0.0, %v632
    %v634 = vpop.f32.mrb[0].mxu0
    %v635 = vadd.f32 0.0, %v634
    %v636 = vpop.f32.mrb[0].mxu0
    %v637 = vpop.f32.mrb[0].mxu0
    %638 = vdwg.mxu0
    %639 = vmatprep.subr.bf16.mxu0 0
    %640 = vmatpush1.bf16.msra.mxu0 %v441
    %641 = vmatprep.subr.bf16.mxu0 0
    %642 = vmatpush1.bf16.msra.mxu0 %v444
    %643 = vmatprep.subr.bf16.mxu0 0
    %644 = vmatpush1.bf16.msra.mxu0 %v447
    %645 = vmatprep.subr.bf16.mxu0 0
    %646 = vmatpush1.bf16.msra.mxu0 %v450
    %647 = vmatprep.subr.bf16.mxu0 0
    %648 = vmatpush1.bf16.msra.mxu0 %v453
    %649 = vmatprep.subr.bf16.mxu0 0
    %650 = vmatpush1.bf16.msra.mxu0 %v456
    %651 = vmatprep.subr.bf16.mxu0 0
    %652 = vmatpush1.bf16.msra.mxu0 %v459
    %653 = vmatprep.subr.bf16.mxu0 0
    %654 = vmatpush1.bf16.msra.mxu0 %v462
    %655 = vmatprep.subr.bf16.mxu0 0
    %656 = vmatpush1.bf16.msra.mxu0 0
    %657 = vmatprep.subr.bf16.mxu0 0
    %658 = vmatpush1.bf16.msra.mxu0 0
    %659 = vmatprep.subr.bf16.mxu0 0
    %660 = vmatpush1.bf16.msra.mxu0 0
    %661 = vmatprep.subr.bf16.mxu0 0
    %662 = vmatpush1.bf16.msra.mxu0 0
    %663 = vmatprep.subr.bf16.mxu0 0
    %664 = vmatpush1.bf16.msra.mxu0 0
    %665 = vmatprep.subr.bf16.mxu0 0
    %666 = vmatpush1.bf16.msra.mxu0 0
    %667 = vmatprep.subr.bf16.mxu0 0
    %668 = vmatpush1.bf16.msra.mxu0 0
    %669 = vmatprep.subr.bf16.mxu0 0
    %670 = vmatpush1.bf16.msra.mxu0 0
    %671 = vmatprep.mubr.bf16.mxu0 0
    %672 = vmatmul.mubr.bf16.gmra.mrb[0].mxu0 %v597
    %v673 = vpop.f32.mrb[0].mxu0
    %v674 = vadd.f32 0.0, %v673
    %v675 = vpop.f32.mrb[0].mxu0
    %v676 = vpop.f32.mrb[0].mxu0
    %v677 = vpop.f32.mrb[0].mxu0
    %678 = vdwg.mxu0
    %v681 = vrot.slane %v633, 7
    %v682 = vrot.slane %v635, 7
    %v685 = vadd.f32 %v322, %v681
    %v686 = vadd.f32 %v323, %v682
    %v687 = vxor.u32 %v685, 2147483648
    %v688 = vxor.u32 %v686, 2147483648
    %v689 = vmul.f32 %v687, 1.442695
    %v690 = vpow.pop %v689
    %v691 = vmul.f32 %v688, 1.442695
    %v692 = vpow.pop %v691
    %v693 = vadd.f32 %v690, 1.0
    %v694 = vadd.f32 %v692, 1.0
    %v695 = vrcp.pop %v693
    %v696 = vmul.f32 1.0, %v695
    %v697 = vrcp.pop %v694
    %v698 = vmul.f32 1.0, %v697
    %v699 = vadd.f32 %v674, %v317
    %v701 = vrot.slane %v699, 7
    %v703 = vmul.f32 %v696, %v701
    %v704 = vadd.f32 %v324, %v703
    %v705 = vtanh.pop %v704
    %v706 = vsub.f32 1.0, %v698
    %v707 = vmul.f32 %v706, %v705
    %v709 = vrot.slane %v593, 7
    %v711 = vmul.f32 %v698, %v709
    %v712 = vadd.f32 %v707, %v711
    %s713 = scalar_select %p596, 1, 0
    %v714 = vstv %s713
    %vm715 = vcmp.eq.s32.totalorder %v714, 1
    %v716 = vsel %vm715, %v712, %v709
    %v717 = vsel %vm715, %v712, 0.0
    %s718 = sadd.s32 0, 2
    %p719 = scmp.lt.s32.totalorder %s718, 8
    %v720 = vpack.c.bf16 %v716, %v716
    %v722 = vshrl.u32 %v720, 16
    %725 = vmatprep.subr.bf16.mxu0 %v440
    %726 = vmatpush1.bf16.msra.mxu0 %v439
    %727 = vmatprep.subr.bf16.mxu0 %v443
    %728 = vmatpush1.bf16.msra.mxu0 %v442
    %729 = vmatprep.subr.bf16.mxu0 %v446
    %730 = vmatpush1.bf16.msra.mxu0 %v445
    %731 = vmatprep.subr.bf16.mxu0 %v449
    %732 = vmatpush1.bf16.msra.mxu0 %v448
    %733 = vmatprep.subr.bf16.mxu0 %v452
    %734 = vmatpush1.bf16.msra.mxu0 %v451
    %735 = vmatprep.subr.bf16.mxu0 %v455
    %736 = vmatpush1.bf16.msra.mxu0 %v454
    %737 = vmatprep.subr.bf16.mxu0 %v458
    %738 = vmatpush1.bf16.msra.mxu0 %v457
    %739 = vmatprep.subr.bf16.mxu0 %v461
    %740 = vmatpush1.bf16.msra.mxu0 %v460
    %741 = vmatprep.subr.bf16.mxu0 0
    %742 = vmatpush1.bf16.msra.mxu0 0
    %743 = vmatprep.subr.bf16.mxu0 0
    %744 = vmatpush1.bf16.msra.mxu0 0
    %745 = vmatprep.subr.bf16.mxu0 0
    %746 = vmatpush1.bf16.msra.mxu0 0
    %747 = vmatprep.subr.bf16.mxu0 0
    %748 = vmatpush1.bf16.msra.mxu0 0
    %749 = vmatprep.subr.bf16.mxu0 0
    %750 = vmatpush1.bf16.msra.mxu0 0
    %751 = vmatprep.subr.bf16.mxu0 0
    %752 = vmatpush1.bf16.msra.mxu0 0
    %753 = vmatprep.subr.bf16.mxu0 0
    %754 = vmatpush1.bf16.msra.mxu0 0
    %755 = vmatprep.subr.bf16.mxu0 0
    %756 = vmatpush1.bf16.msra.mxu0 0
    %757 = vmatprep.mubr.bf16.mxu0 0
    %758 = vmatmul.mubr.bf16.gmra.mrb[0].mxu0 %v722
    %v759 = vpop.f32.mrb[0].mxu0
    %v760 = vadd.f32 0.0, %v759
    %v761 = vpop.f32.mrb[0].mxu0
    %v762 = vadd.f32 0.0, %v761
    %v763 = vpop.f32.mrb[0].mxu0
    %v764 = vpop.f32.mrb[0].mxu0
    %765 = vdwg.mxu0
    %766 = vmatprep.subr.bf16.mxu0 0
    %767 = vmatpush1.bf16.msra.mxu0 %v441
    %768 = vmatprep.subr.bf16.mxu0 0
    %769 = vmatpush1.bf16.msra.mxu0 %v444
    %770 = vmatprep.subr.bf16.mxu0 0
    %771 = vmatpush1.bf16.msra.mxu0 %v447
    %772 = vmatprep.subr.bf16.mxu0 0
    %773 = vmatpush1.bf16.msra.mxu0 %v450
    %774 = vmatprep.subr.bf16.mxu0 0
    %775 = vmatpush1.bf16.msra.mxu0 %v453
    %776 = vmatprep.subr.bf16.mxu0 0
    %777 = vmatpush1.bf16.msra.mxu0 %v456
    %778 = vmatprep.subr.bf16.mxu0 0
    %779 = vmatpush1.bf16.msra.mxu0 %v459
    %780 = vmatprep.subr.bf16.mxu0 0
    %781 = vmatpush1.bf16.msra.mxu0 %v462
    %782 = vmatprep.subr.bf16.mxu0 0
    %783 = vmatpush1.bf16.msra.mxu0 0
    %784 = vmatprep.subr.bf16.mxu0 0
    %785 = vmatpush1.bf16.msra.mxu0 0
    %786 = vmatprep.subr.bf16.mxu0 0
    %787 = vmatpush1.bf16.msra.mxu0 0
    %788 = vmatprep.subr.bf16.mxu0 0
    %789 = vmatpush1.bf16.msra.mxu0 0
    %790 = vmatprep.subr.bf16.mxu0 0
    %791 = vmatpush1.bf16.msra.mxu0 0
    %792 = vmatprep.subr.bf16.mxu0 0
    %793 = vmatpush1.bf16.msra.mxu0 0
    %794 = vmatprep.subr.bf16.mxu0 0
    %795 = vmatpush1.bf16.msra.mxu0 0
    %796 = vmatprep.subr.bf16.mxu0 0
    %797 = vmatpush1.bf16.msra.mxu0 0
    %798 = vmatprep.mubr.bf16.mxu0 0
    %799 = vmatmul.mubr.bf16.gmra.mrb[0].mxu0 %v722
    %v800 = vpop.f32.mrb[0].mxu0
    %v801 = vadd.f32 0.0, %v800
    %v802 = vpop.f32.mrb[0].mxu0
    %v803 = vpop.f32.mrb[0].mxu0
    %v804 = vpop.f32.mrb[0].mxu0
    %805 = vdwg.mxu0
    %v808 = vrot.slane %v760, 6
    %v809 = vrot.slane %v762, 6
    %v812 = vadd.f32 %v322, %v808
    %v813 = vadd.f32 %v323, %v809
    %v814 = vxor.u32 %v812, 2147483648
    %v815 = vxor.u32 %v813, 2147483648
    %v816 = vmul.f32 %v814, 1.442695
    %v817 = vpow.pop %v816
    %v818 = vmul.f32 %v815, 1.442695
    %v819 = vpow.pop %v818
    %v820 = vadd.f32 %v817, 1.0
    %v821 = vadd.f32 %v819, 1.0
    %v822 = vrcp.pop %v820
    %v823 = vmul.f32 1.0, %v822
    %v824 = vrcp.pop %v821
    %v825 = vmul.f32 1.0, %v824
    %v826 = vadd.f32 %v801, %v317
    %v828 = vrot.slane %v826, 6
    %v830 = vmul.f32 %v823, %v828
    %v831 = vadd.f32 %v324, %v830
    %v832 = vtanh.pop %v831
    %v833 = vsub.f32 1.0, %v825
    %v834 = vmul.f32 %v833, %v832
    %v836 = vrot.slane %v716, 7
    %v838 = vmul.f32 %v825, %v836
    %v839 = vadd.f32 %v834, %v838
    %s840 = scalar_select %p719, 1, 0
    %v841 = vstv %s840
    %vm842 = vcmp.eq.s32.totalorder %v841, 1
    %v843 = vsel %vm842, %v839, %v836
    %v844 = vsel %vm842, %v839, 0.0
    %s845 = sadd.s32 0, 3
    %p846 = scmp.lt.s32.totalorder %s845, 8
    %v847 = vpack.c.bf16 %v843, %v843
    %v849 = vrot.slane %v847, 1
    %851 = vmatprep.subr.bf16.mxu0 %v440
    %852 = vmatpush1.bf16.msra.mxu0 %v439
    %853 = vmatprep.subr.bf16.mxu0 %v443
    %854 = vmatpush1.bf16.msra.mxu0 %v442
    %855 = vmatprep.subr.bf16.mxu0 %v446
    %856 = vmatpush1.bf16.msra.mxu0 %v445
    %857 = vmatprep.subr.bf16.mxu0 %v449
    %858 = vmatpush1.bf16.msra.mxu0 %v448
    %859 = vmatprep.subr.bf16.mxu0 %v452
    %860 = vmatpush1.bf16.msra.mxu0 %v451
    %861 = vmatprep.subr.bf16.mxu0 %v455
    %862 = vmatpush1.bf16.msra.mxu0 %v454
    %863 = vmatprep.subr.bf16.mxu0 %v458
    %864 = vmatpush1.bf16.msra.mxu0 %v457
    %865 = vmatprep.subr.bf16.mxu0 %v461
    %866 = vmatpush1.bf16.msra.mxu0 %v460
    %867 = vmatprep.subr.bf16.mxu0 0
    %868 = vmatpush1.bf16.msra.mxu0 0
    %869 = vmatprep.subr.bf16.mxu0 0
    %870 = vmatpush1.bf16.msra.mxu0 0
    %871 = vmatprep.subr.bf16.mxu0 0
    %872 = vmatpush1.bf16.msra.mxu0 0
    %873 = vmatprep.subr.bf16.mxu0 0
    %874 = vmatpush1.bf16.msra.mxu0 0
    %875 = vmatprep.subr.bf16.mxu0 0
    %876 = vmatpush1.bf16.msra.mxu0 0
    %877 = vmatprep.subr.bf16.mxu0 0
    %878 = vmatpush1.bf16.msra.mxu0 0
    %879 = vmatprep.subr.bf16.mxu0 0
    %880 = vmatpush1.bf16.msra.mxu0 0
    %881 = vmatprep.subr.bf16.mxu0 0
    %882 = vmatpush1.bf16.msra.mxu0 0
    %883 = vmatprep.mubr.bf16.mxu0 0
    %884 = vmatmul.mubr.bf16.gmra.mrb[0].mxu0 %v849
    %v885 = vpop.f32.mrb[0].mxu0
    %v886 = vadd.f32 0.0, %v885
    %v887 = vpop.f32.mrb[0].mxu0
    %v888 = vadd.f32 0.0, %v887
    %v889 = vpop.f32.mrb[0].mxu0
    %v890 = vpop.f32.mrb[0].mxu0
    %891 = vdwg.mxu0
    %892 = vmatprep.subr.bf16.mxu0 0
    %893 = vmatpush1.bf16.msra.mxu0 %v441
    %894 = vmatprep.subr.bf16.mxu0 0
    %895 = vmatpush1.bf16.msra.mxu0 %v444
    %896 = vmatprep.subr.bf16.mxu0 0
    %897 = vmatpush1.bf16.msra.mxu0 %v447
    %898 = vmatprep.subr.bf16.mxu0 0
    %899 = vmatpush1.bf16.msra.mxu0 %v450
    %900 = vmatprep.subr.bf16.mxu0 0
    %901 = vmatpush1.bf16.msra.mxu0 %v453
    %902 = vmatprep.subr.bf16.mxu0 0
    %903 = vmatpush1.bf16.msra.mxu0 %v456
    %904 = vmatprep.subr.bf16.mxu0 0
    %905 = vmatpush1.bf16.msra.mxu0 %v459
    %906 = vmatprep.subr.bf16.mxu0 0
    %907 = vmatpush1.bf16.msra.mxu0 %v462
    %908 = vmatprep.subr.bf16.mxu0 0
    %909 = vmatpush1.bf16.msra.mxu0 0
    %910 = vmatprep.subr.bf16.mxu0 0
    %911 = vmatpush1.bf16.msra.mxu0 0
    %912 = vmatprep.subr.bf16.mxu0 0
    %913 = vmatpush1.bf16.msra.mxu0 0
    %914 = vmatprep.subr.bf16.mxu0 0
    %915 = vmatpush1.bf16.msra.mxu0 0
    %916 = vmatprep.subr.bf16.mxu0 0
    %917 = vmatpush1.bf16.msra.mxu0 0
    %918 = vmatprep.subr.bf16.mxu0 0
    %919 = vmatpush1.bf16.msra.mxu0 0
    %920 = vmatprep.subr.bf16.mxu0 0
    %921 = vmatpush1.bf16.msra.mxu0 0
    %922 = vmatprep.subr.bf16.mxu0 0
    %923 = vmatpush1.bf16.msra.mxu0 0
    %924 = vmatprep.mubr.bf16.mxu0 0
    %925 = vmatmul.mubr.bf16.gmra.mrb[0].mxu0 %v849
    %v926 = vpop.f32.mrb[0].mxu0
    %v927 = vadd.f32 0.0, %v926
    %v928 = vpop.f32.mrb[0].mxu0
    %v929 = vpop.f32.mrb[0].mxu0
    %v930 = vpop.f32.mrb[0].mxu0
    %931 = vdwg.mxu0
    %v934 = vrot.slane %v886, 5
    %v935 = vrot.slane %v888, 5
    %v938 = vadd.f32 %v322, %v934
    %v939 = vadd.f32 %v323, %v935
    %v940 = vxor.u32 %v938, 2147483648
    %v941 = vxor.u32 %v939, 2147483648
    %v942 = vmul.f32 %v940, 1.442695
    %v943 = vpow.pop %v942
    %v944 = vmul.f32 %v941, 1.442695
    %v945 = vpow.pop %v944
    %v946 = vadd.f32 %v943, 1.0
    %v947 = vadd.f32 %v945, 1.0
    %v948 = vrcp.pop %v946
    %v949 = vmul.f32 1.0, %v948
    %v950 = vrcp.pop %v947
    %v951 = vmul.f32 1.0, %v950
    %v952 = vadd.f32 %v927, %v317
    %v954 = vrot.slane %v952, 5
    %v956 = vmul.f32 %v949, %v954
    %v957 = vadd.f32 %v324, %v956
    %v958 = vtanh.pop %v957
    %v959 = vsub.f32 1.0, %v951
    %v960 = vmul.f32 %v959, %v958
    %v962 = vrot.slane %v843, 7
    %v964 = vmul.f32 %v951, %v962
    %v965 = vadd.f32 %v960, %v964
    %s966 = scalar_select %p846, 1, 0
    %v967 = vstv %s966
    %vm968 = vcmp.eq.s32.totalorder %v967, 1
    %v969 = vsel %vm968, %v965, %v962
    %v970 = vsel %vm968, %v965, 0.0
    %s971 = sadd.s32 0, 4
    %p972 = scmp.lt.s32.totalorder %s971, 8
    %v973 = vpack.c.bf16 %v969, %v969
    %v975 = vshrl.u32 %v973, 16
    %v977 = vrot.slane %v975, 1
    %979 = vmatprep.subr.bf16.mxu0 %v440
    %980 = vmatpush1.bf16.msra.mxu0 %v439
    %981 = vmatprep.subr.bf16.mxu0 %v443
    %982 = vmatpush1.bf16.msra.mxu0 %v442
    %983 = vmatprep.subr.bf16.mxu0 %v446
    %984 = vmatpush1.bf16.msra.mxu0 %v445
    %985 = vmatprep.subr.bf16.mxu0 %v449
    %986 = vmatpush1.bf16.msra.mxu0 %v448
    %987 = vmatprep.subr.bf16.mxu0 %v452
    %988 = vmatpush1.bf16.msra.mxu0 %v451
    %989 = vmatprep.subr.bf16.mxu0 %v455
    %990 = vmatpush1.bf16.msra.mxu0 %v454
    %991 = vmatprep.subr.bf16.mxu0 %v458
    %992 = vmatpush1.bf16.msra.mxu0 %v457
    %993 = vmatprep.subr.bf16.mxu0 %v461
    %994 = vmatpush1.bf16.msra.mxu0 %v460
    %995 = vmatprep.subr.bf16.mxu0 0
    %996 = vmatpush1.bf16.msra.mxu0 0
    %997 = vmatprep.subr.bf16.mxu0 0
    %998 = vmatpush1.bf16.msra.mxu0 0
    %999 = vmatprep.subr.bf16.mxu0 0
    %1000 = vmatpush1.bf16.msra.mxu0 0
    %1001 = vmatprep.subr.bf16.mxu0 0
    %1002 = vmatpush1.bf16.msra.mxu0 0
    %1003 = vmatprep.subr.bf16.mxu0 0
    %1004 = vmatpush1.bf16.msra.mxu0 0
    %1005 = vmatprep.subr.bf16.mxu0 0
    %1006 = vmatpush1.bf16.msra.mxu0 0
    %1007 = vmatprep.subr.bf16.mxu0 0
    %1008 = vmatpush1.bf16.msra.mxu0 0
    %1009 = vmatprep.subr.bf16.mxu0 0
    %1010 = vmatpush1.bf16.msra.mxu0 0
    %1011 = vmatprep.mubr.bf16.mxu0 0
    %1012 = vmatmul.mubr.bf16.gmra.mrb[0].mxu0 %v977
    %v1013 = vpop.f32.mrb[0].mxu0
    %v1014 = vadd.f32 0.0, %v1013
    %v1015 = vpop.f32.mrb[0].mxu0
    %v1016 = vadd.f32 0.0, %v1015
    %v1017 = vpop.f32.mrb[0].mxu0
    %v1018 = vpop.f32.mrb[0].mxu0
    %1019 = vdwg.mxu0
    %1020 = vmatprep.subr.bf16.mxu0 0
    %1021 = vmatpush1.bf16.msra.mxu0 %v441
    %1022 = vmatprep.subr.bf16.mxu0 0
    %1023 = vmatpush1.bf16.msra.mxu0 %v444
    %1024 = vmatprep.subr.bf16.mxu0 0
    %1025 = vmatpush1.bf16.msra.mxu0 %v447
    %1026 = vmatprep.subr.bf16.mxu0 0
    %1027 = vmatpush1.bf16.msra.mxu0 %v450
    %1028 = vmatprep.subr.bf16.mxu0 0
    %1029 = vmatpush1.bf16.msra.mxu0 %v453
    %1030 = vmatprep.subr.bf16.mxu0 0
    %1031 = vmatpush1.bf16.msra.mxu0 %v456
    %1032 = vmatprep.subr.bf16.mxu0 0
    %1033 = vmatpush1.bf16.msra.mxu0 %v459
    %1034 = vmatprep.subr.bf16.mxu0 0
    %1035 = vmatpush1.bf16.msra.mxu0 %v462
    %1036 = vmatprep.subr.bf16.mxu0 0
    %1037 = vmatpush1.bf16.msra.mxu0 0
    %1038 = vmatprep.subr.bf16.mxu0 0
    %1039 = vmatpush1.bf16.msra.mxu0 0
    %1040 = vmatprep.subr.bf16.mxu0 0
    %1041 = vmatpush1.bf16.msra.mxu0 0
    %1042 = vmatprep.subr.bf16.mxu0 0
    %1043 = vmatpush1.bf16.msra.mxu0 0
    %1044 = vmatprep.subr.bf16.mxu0 0
    %1045 = vmatpush1.bf16.msra.mxu0 0
    %1046 = vmatprep.subr.bf16.mxu0 0
    %1047 = vmatpush1.bf16.msra.mxu0 0
    %1048 = vmatprep.subr.bf16.mxu0 0
    %1049 = vmatpush1.bf16.msra.mxu0 0
    %1050 = vmatprep.subr.bf16.mxu0 0
    %1051 = vmatpush1.bf16.msra.mxu0 0
    %1052 = vmatprep.mubr.bf16.mxu0 0
    %1053 = vmatmul.mubr.bf16.gmra.mrb[0].mxu0 %v977
    %v1054 = vpop.f32.mrb[0].mxu0
    %v1055 = vadd.f32 0.0, %v1054
    %v1056 = vpop.f32.mrb[0].mxu0
    %v1057 = vpop.f32.mrb[0].mxu0
    %v1058 = vpop.f32.mrb[0].mxu0
    %1059 = vdwg.mxu0
    %v1062 = vrot.slane %v1014, 4
    %v1063 = vrot.slane %v1016, 4
    %v1066 = vadd.f32 %v322, %v1062
    %v1067 = vadd.f32 %v323, %v1063
    %v1068 = vxor.u32 %v1066, 2147483648
    %v1069 = vxor.u32 %v1067, 2147483648
    %v1070 = vmul.f32 %v1068, 1.442695
    %v1071 = vpow.pop %v1070
    %v1072 = vmul.f32 %v1069, 1.442695
    %v1073 = vpow.pop %v1072
    %v1074 = vadd.f32 %v1071, 1.0
    %v1075 = vadd.f32 %v1073, 1.0
    %v1076 = vrcp.pop %v1074
    %v1077 = vmul.f32 1.0, %v1076
    %v1078 = vrcp.pop %v1075
    %v1079 = vmul.f32 1.0, %v1078
    %v1080 = vadd.f32 %v1055, %v317
    %v1082 = vrot.slane %v1080, 4
    %v1084 = vmul.f32 %v1077, %v1082
    %v1085 = vadd.f32 %v324, %v1084
    %v1086 = vtanh.pop %v1085
    %v1087 = vsub.f32 1.0, %v1079
    %v1088 = vmul.f32 %v1087, %v1086
    %v1090 = vrot.slane %v969, 7
    %v1092 = vmul.f32 %v1079, %v1090
    %v1093 = vadd.f32 %v1088, %v1092
    %s1094 = scalar_select %p972, 1, 0
    %v1095 = vstv %s1094
    %vm1096 = vcmp.eq.s32.totalorder %v1095, 1
    %v1097 = vsel %vm1096, %v1093, %v1090
    %v1098 = vsel %vm1096, %v1093, 0.0
    %s1099 = sadd.s32 0, 5
    %p1100 = scmp.lt.s32.totalorder %s1099, 8
    %v1101 = vpack.c.bf16 %v1097, %v1097
    %v1103 = vrot.slane %v1101, 2
    %1105 = vmatprep.subr.bf16.mxu0 %v440
    %1106 = vmatpush1.bf16.msra.mxu0 %v439
    %1107 = vmatprep.subr.bf16.mxu0 %v443
    %1108 = vmatpush1.bf16.msra.mxu0 %v442
    %1109 = vmatprep.subr.bf16.mxu0 %v446
    %1110 = vmatpush1.bf16.msra.mxu0 %v445
    %1111 = vmatprep.subr.bf16.mxu0 %v449
    %1112 = vmatpush1.bf16.msra.mxu0 %v448
    %1113 = vmatprep.subr.bf16.mxu0 %v452
    %1114 = vmatpush1.bf16.msra.mxu0 %v451
    %1115 = vmatprep.subr.bf16.mxu0 %v455
    %1116 = vmatpush1.bf16.msra.mxu0 %v454
    %1117 = vmatprep.subr.bf16.mxu0 %v458
    %1118 = vmatpush1.bf16.msra.mxu0 %v457
    %1119 = vmatprep.subr.bf16.mxu0 %v461
    %1120 = vmatpush1.bf16.msra.mxu0 %v460
    %1121 = vmatprep.subr.bf16.mxu0 0
    %1122 = vmatpush1.bf16.msra.mxu0 0
    %1123 = vmatprep.subr.bf16.mxu0 0
    %1124 = vmatpush1.bf16.msra.mxu0 0
    %1125 = vmatprep.subr.bf16.mxu0 0
    %1126 = vmatpush1.bf16.msra.mxu0 0
    %1127 = vmatprep.subr.bf16.mxu0 0
    %1128 = vmatpush1.bf16.msra.mxu0 0
    %1129 = vmatprep.subr.bf16.mxu0 0
    %1130 = vmatpush1.bf16.msra.mxu0 0
    %1131 = vmatprep.subr.bf16.mxu0 0
    %1132 = vmatpush1.bf16.msra.mxu0 0
    %1133 = vmatprep.subr.bf16.mxu0 0
    %1134 = vmatpush1.bf16.msra.mxu0 0
    %1135 = vmatprep.subr.bf16.mxu0 0
    %1136 = vmatpush1.bf16.msra.mxu0 0
    %1137 = vmatprep.mubr.bf16.mxu0 0
    %1138 = vmatmul.mubr.bf16.gmra.mrb[0].mxu0 %v1103
    %v1139 = vpop.f32.mrb[0].mxu0
    %v1140 = vadd.f32 0.0, %v1139
    %v1141 = vpop.f32.mrb[0].mxu0
    %v1142 = vadd.f32 0.0, %v1141
    %v1143 = vpop.f32.mrb[0].mxu0
    %v1144 = vpop.f32.mrb[0].mxu0
    %1145 = vdwg.mxu0
    %1146 = vmatprep.subr.bf16.mxu0 0
    %1147 = vmatpush1.bf16.msra.mxu0 %v441
    %1148 = vmatprep.subr.bf16.mxu0 0
    %1149 = vmatpush1.bf16.msra.mxu0 %v444
    %1150 = vmatprep.subr.bf16.mxu0 0
    %1151 = vmatpush1.bf16.msra.mxu0 %v447
    %1152 = vmatprep.subr.bf16.mxu0 0
    %1153 = vmatpush1.bf16.msra.mxu0 %v450
    %1154 = vmatprep.subr.bf16.mxu0 0
    %1155 = vmatpush1.bf16.msra.mxu0 %v453
    %1156 = vmatprep.subr.bf16.mxu0 0
    %1157 = vmatpush1.bf16.msra.mxu0 %v456
    %1158 = vmatprep.subr.bf16.mxu0 0
    %1159 = vmatpush1.bf16.msra.mxu0 %v459
    %1160 = vmatprep.subr.bf16.mxu0 0
    %1161 = vmatpush1.bf16.msra.mxu0 %v462
    %1162 = vmatprep.subr.bf16.mxu0 0
    %1163 = vmatpush1.bf16.msra.mxu0 0
    %1164 = vmatprep.subr.bf16.mxu0 0
    %1165 = vmatpush1.bf16.msra.mxu0 0
    %1166 = vmatprep.subr.bf16.mxu0 0
    %1167 = vmatpush1.bf16.msra.mxu0 0
    %1168 = vmatprep.subr.bf16.mxu0 0
    %1169 = vmatpush1.bf16.msra.mxu0 0
    %1170 = vmatprep.subr.bf16.mxu0 0
    %1171 = vmatpush1.bf16.msra.mxu0 0
    %1172 = vmatprep.subr.bf16.mxu0 0
    %1173 = vmatpush1.bf16.msra.mxu0 0
    %1174 = vmatprep.subr.bf16.mxu0 0
    %1175 = vmatpush1.bf16.msra.mxu0 0
    %1176 = vmatprep.subr.bf16.mxu0 0
    %1177 = vmatpush1.bf16.msra.mxu0 0
    %1178 = vmatprep.mubr.bf16.mxu0 0
    %1179 = vmatmul.mubr.bf16.gmra.mrb[0].mxu0 %v1103
    %v1180 = vpop.f32.mrb[0].mxu0
    %v1181 = vadd.f32 0.0, %v1180
    %v1182 = vpop.f32.mrb[0].mxu0
    %v1183 = vpop.f32.mrb[0].mxu0
    %v1184 = vpop.f32.mrb[0].mxu0
    %1185 = vdwg.mxu0
    %v1188 = vrot.slane %v1140, 3
    %v1189 = vrot.slane %v1142, 3
    %v1192 = vadd.f32 %v322, %v1188
    %v1193 = vadd.f32 %v323, %v1189
    %v1194 = vxor.u32 %v1192, 2147483648
    %v1195 = vxor.u32 %v1193, 2147483648
    %v1196 = vmul.f32 %v1194, 1.442695
    %v1197 = vpow.pop %v1196
    %v1198 = vmul.f32 %v1195, 1.442695
    %v1199 = vpow.pop %v1198
    %v1200 = vadd.f32 %v1197, 1.0
    %v1201 = vadd.f32 %v1199, 1.0
    %v1202 = vrcp.pop %v1200
    %v1203 = vmul.f32 1.0, %v1202
    %v1204 = vrcp.pop %v1201
    %v1205 = vmul.f32 1.0, %v1204
    %v1206 = vadd.f32 %v1181, %v317
    %v1208 = vrot.slane %v1206, 3
    %v1210 = vmul.f32 %v1203, %v1208
    %v1211 = vadd.f32 %v324, %v1210
    %v1212 = vtanh.pop %v1211
    %v1213 = vsub.f32 1.0, %v1205
    %v1214 = vmul.f32 %v1213, %v1212
    %v1216 = vrot.slane %v1097, 7
    %v1218 = vmul.f32 %v1205, %v1216
    %v1219 = vadd.f32 %v1214, %v1218
    %s1220 = scalar_select %p1100, 1, 0
    %v1221 = vstv %s1220
    %vm1222 = vcmp.eq.s32.totalorder %v1221, 1
    %v1223 = vsel %vm1222, %v1219, %v1216
    %v1224 = vsel %vm1222, %v1219, 0.0
    %s1225 = sadd.s32 0, 6
    %p1226 = scmp.lt.s32.totalorder %s1225, 8
    %v1227 = vpack.c.bf16 %v1223, %v1223
    %v1229 = vshrl.u32 %v1227, 16
    %v1231 = vrot.slane %v1229, 2
    %1233 = vmatprep.subr.bf16.mxu0 %v440
    %1234 = vmatpush1.bf16.msra.mxu0 %v439
    %1235 = vmatprep.subr.bf16.mxu0 %v443
    %1236 = vmatpush1.bf16.msra.mxu0 %v442
    %1237 = vmatprep.subr.bf16.mxu0 %v446
    %1238 = vmatpush1.bf16.msra.mxu0 %v445
    %1239 = vmatprep.subr.bf16.mxu0 %v449
    %1240 = vmatpush1.bf16.msra.mxu0 %v448
    %1241 = vmatprep.subr.bf16.mxu0 %v452
    %1242 = vmatpush1.bf16.msra.mxu0 %v451
    %1243 = vmatprep.subr.bf16.mxu0 %v455
    %1244 = vmatpush1.bf16.msra.mxu0 %v454
    %1245 = vmatprep.subr.bf16.mxu0 %v458
    %1246 = vmatpush1.bf16.msra.mxu0 %v457
    %1247 = vmatprep.subr.bf16.mxu0 %v461
    %1248 = vmatpush1.bf16.msra.mxu0 %v460
    %1249 = vmatprep.subr.bf16.mxu0 0
    %1250 = vmatpush1.bf16.msra.mxu0 0
    %1251 = vmatprep.subr.bf16.mxu0 0
    %1252 = vmatpush1.bf16.msra.mxu0 0
    %1253 = vmatprep.subr.bf16.mxu0 0
    %1254 = vmatpush1.bf16.msra.mxu0 0
    %1255 = vmatprep.subr.bf16.mxu0 0
    %1256 = vmatpush1.bf16.msra.mxu0 0
    %1257 = vmatprep.subr.bf16.mxu0 0
    %1258 = vmatpush1.bf16.msra.mxu0 0
    %1259 = vmatprep.subr.bf16.mxu0 0
    %1260 = vmatpush1.bf16.msra.mxu0 0
    %1261 = vmatprep.subr.bf16.mxu0 0
    %1262 = vmatpush1.bf16.msra.mxu0 0
    %1263 = vmatprep.subr.bf16.mxu0 0
    %1264 = vmatpush1.bf16.msra.mxu0 0
    %1265 = vmatprep.mubr.bf16.mxu0 0
    %1266 = vmatmul.mubr.bf16.gmra.mrb[0].mxu0 %v1231
    %v1267 = vpop.f32.mrb[0].mxu0
    %v1268 = vadd.f32 0.0, %v1267
    %v1269 = vpop.f32.mrb[0].mxu0
    %v1270 = vadd.f32 0.0, %v1269
    %v1271 = vpop.f32.mrb[0].mxu0
    %v1272 = vpop.f32.mrb[0].mxu0
    %1273 = vdwg.mxu0
    %1274 = vmatprep.subr.bf16.mxu0 0
    %1275 = vmatpush1.bf16.msra.mxu0 %v441
    %1276 = vmatprep.subr.bf16.mxu0 0
    %1277 = vmatpush1.bf16.msra.mxu0 %v444
    %1278 = vmatprep.subr.bf16.mxu0 0
    %1279 = vmatpush1.bf16.msra.mxu0 %v447
    %1280 = vmatprep.subr.bf16.mxu0 0
    %1281 = vmatpush1.bf16.msra.mxu0 %v450
    %1282 = vmatprep.subr.bf16.mxu0 0
    %1283 = vmatpush1.bf16.msra.mxu0 %v453
    %1284 = vmatprep.subr.bf16.mxu0 0
    %1285 = vmatpush1.bf16.msra.mxu0 %v456
    %1286 = vmatprep.subr.bf16.mxu0 0
    %1287 = vmatpush1.bf16.msra.mxu0 %v459
    %1288 = vmatprep.subr.bf16.mxu0 0
    %1289 = vmatpush1.bf16.msra.mxu0 %v462
    %1290 = vmatprep.subr.bf16.mxu0 0
    %1291 = vmatpush1.bf16.msra.mxu0 0
    %1292 = vmatprep.subr.bf16.mxu0 0
    %1293 = vmatpush1.bf16.msra.mxu0 0
    %1294 = vmatprep.subr.bf16.mxu0 0
    %1295 = vmatpush1.bf16.msra.mxu0 0
    %1296 = vmatprep.subr.bf16.mxu0 0
    %1297 = vmatpush1.bf16.msra.mxu0 0
    %1298 = vmatprep.subr.bf16.mxu0 0
    %1299 = vmatpush1.bf16.msra.mxu0 0
    %1300 = vmatprep.subr.bf16.mxu0 0
    %1301 = vmatpush1.bf16.msra.mxu0 0
    %1302 = vmatprep.subr.bf16.mxu0 0
    %1303 = vmatpush1.bf16.msra.mxu0 0
    %1304 = vmatprep.subr.bf16.mxu0 0
    %1305 = vmatpush1.bf16.msra.mxu0 0
    %1306 = vmatprep.mubr.bf16.mxu0 0
    %1307 = vmatmul.mubr.bf16.gmra.mrb[0].mxu0 %v1231
    %v1308 = vpop.f32.mrb[0].mxu0
    %v1309 = vadd.f32 0.0, %v1308
    %v1310 = vpop.f32.mrb[0].mxu0
    %v1311 = vpop.f32.mrb[0].mxu0
    %v1312 = vpop.f32.mrb[0].mxu0
    %1313 = vdwg.mxu0
    %v1316 = vrot.slane %v1268, 2
    %v1317 = vrot.slane %v1270, 2
    %v1320 = vadd.f32 %v322, %v1316
    %v1321 = vadd.f32 %v323, %v1317
    %v1322 = vxor.u32 %v1320, 2147483648
    %v1323 = vxor.u32 %v1321, 2147483648
    %v1324 = vmul.f32 %v1322, 1.442695
    %v1325 = vpow.pop %v1324
    %v1326 = vmul.f32 %v1323, 1.442695
    %v1327 = vpow.pop %v1326
    %v1328 = vadd.f32 %v1325, 1.0
    %v1329 = vadd.f32 %v1327, 1.0
    %v1330 = vrcp.pop %v1328
    %v1331 = vmul.f32 1.0, %v1330
    %v1332 = vrcp.pop %v1329
    %v1333 = vmul.f32 1.0, %v1332
    %v1334 = vadd.f32 %v1309, %v317
    %v1336 = vrot.slane %v1334, 2
    %v1338 = vmul.f32 %v1331, %v1336
    %v1339 = vadd.f32 %v324, %v1338
    %v1340 = vtanh.pop %v1339
    %v1341 = vsub.f32 1.0, %v1333
    %v1342 = vmul.f32 %v1341, %v1340
    %v1344 = vrot.slane %v1223, 7
    %v1346 = vmul.f32 %v1333, %v1344
    %v1347 = vadd.f32 %v1342, %v1346
    %s1348 = scalar_select %p1226, 1, 0
    %v1349 = vstv %s1348
    %vm1350 = vcmp.eq.s32.totalorder %v1349, 1
    %v1351 = vsel %vm1350, %v1347, %v1344
    %v1352 = vsel %vm1350, %v1347, 0.0
    %s1353 = sadd.s32 0, 7
    %p1354 = scmp.lt.s32.totalorder %s1353, 8
    %v1355 = vpack.c.bf16 %v1351, %v1351
    %v1357 = vrot.slane %v1355, 3
    %1359 = vmatprep.subr.bf16.mxu0 %v440
    %1360 = vmatpush1.bf16.msra.mxu0 %v439
    %1361 = vmatprep.subr.bf16.mxu0 %v443
    %1362 = vmatpush1.bf16.msra.mxu0 %v442
    %1363 = vmatprep.subr.bf16.mxu0 %v446
    %1364 = vmatpush1.bf16.msra.mxu0 %v445
    %1365 = vmatprep.subr.bf16.mxu0 %v449
    %1366 = vmatpush1.bf16.msra.mxu0 %v448
    %1367 = vmatprep.subr.bf16.mxu0 %v452
    %1368 = vmatpush1.bf16.msra.mxu0 %v451
    %1369 = vmatprep.subr.bf16.mxu0 %v455
    %1370 = vmatpush1.bf16.msra.mxu0 %v454
    %1371 = vmatprep.subr.bf16.mxu0 %v458
    %1372 = vmatpush1.bf16.msra.mxu0 %v457
    %1373 = vmatprep.subr.bf16.mxu0 %v461
    %1374 = vmatpush1.bf16.msra.mxu0 %v460
    %1375 = vmatprep.subr.bf16.mxu0 0
    %1376 = vmatpush1.bf16.msra.mxu0 0
    %1377 = vmatprep.subr.bf16.mxu0 0
    %1378 = vmatpush1.bf16.msra.mxu0 0
    %1379 = vmatprep.subr.bf16.mxu0 0
    %1380 = vmatpush1.bf16.msra.mxu0 0
    %1381 = vmatprep.subr.bf16.mxu0 0
    %1382 = vmatpush1.bf16.msra.mxu0 0
    %1383 = vmatprep.subr.bf16.mxu0 0
    %1384 = vmatpush1.bf16.msra.mxu0 0
    %1385 = vmatprep.subr.bf16.mxu0 0
    %1386 = vmatpush1.bf16.msra.mxu0 0
    %1387 = vmatprep.subr.bf16.mxu0 0
    %1388 = vmatpush1.bf16.msra.mxu0 0
    %1389 = vmatprep.subr.bf16.mxu0 0
    %1390 = vmatpush1.bf16.msra.mxu0 0
    %1391 = vmatprep.mubr.bf16.mxu0 0
    %1392 = vmatmul.mubr.bf16.gmra.mrb[0].mxu0 %v1357
    %v1393 = vpop.f32.mrb[0].mxu0
    %v1394 = vadd.f32 0.0, %v1393
    %v1395 = vpop.f32.mrb[0].mxu0
    %v1396 = vadd.f32 0.0, %v1395
    %v1397 = vpop.f32.mrb[0].mxu0
    %v1398 = vpop.f32.mrb[0].mxu0
    %1399 = vdwg.mxu0
    %1400 = vmatprep.subr.bf16.mxu0 0
    %1401 = vmatpush1.bf16.msra.mxu0 %v441
    %1402 = vmatprep.subr.bf16.mxu0 0
    %1403 = vmatpush1.bf16.msra.mxu0 %v444
    %1404 = vmatprep.subr.bf16.mxu0 0
    %1405 = vmatpush1.bf16.msra.mxu0 %v447
    %1406 = vmatprep.subr.bf16.mxu0 0
    %1407 = vmatpush1.bf16.msra.mxu0 %v450
    %1408 = vmatprep.subr.bf16.mxu0 0
    %1409 = vmatpush1.bf16.msra.mxu0 %v453
    %1410 = vmatprep.subr.bf16.mxu0 0
    %1411 = vmatpush1.bf16.msra.mxu0 %v456
    %1412 = vmatprep.subr.bf16.mxu0 0
    %1413 = vmatpush1.bf16.msra.mxu0 %v459
    %1414 = vmatprep.subr.bf16.mxu0 0
    %1415 = vmatpush1.bf16.msra.mxu0 %v462
    %1416 = vmatprep.subr.bf16.mxu0 0
    %1417 = vmatpush1.bf16.msra.mxu0 0
    %1418 = vmatprep.subr.bf16.mxu0 0
    %1419 = vmatpush1.bf16.msra.mxu0 0
    %1420 = vmatprep.subr.bf16.mxu0 0
    %1421 = vmatpush1.bf16.msra.mxu0 0
    %1422 = vmatprep.subr.bf16.mxu0 0
    %1423 = vmatpush1.bf16.msra.mxu0 0
    %1424 = vmatprep.subr.bf16.mxu0 0
    %1425 = vmatpush1.bf16.msra.mxu0 0
    %1426 = vmatprep.subr.bf16.mxu0 0
    %1427 = vmatpush1.bf16.msra.mxu0 0
    %1428 = vmatprep.subr.bf16.mxu0 0
    %1429 = vmatpush1.bf16.msra.mxu0 0
    %1430 = vmatprep.subr.bf16.mxu0 0
    %1431 = vmatpush1.bf16.msra.mxu0 0
    %1432 = vmatprep.mubr.bf16.mxu0 0
    %1433 = vmatmul.mubr.bf16.gmra.mrb[0].mxu0 %v1357
    %v1434 = vpop.f32.mrb[0].mxu0
    %v1435 = vadd.f32 0.0, %v1434
    %v1436 = vpop.f32.mrb[0].mxu0
    %v1437 = vpop.f32.mrb[0].mxu0
    %v1438 = vpop.f32.mrb[0].mxu0
    %1439 = vdwg.mxu0
    %v1442 = vrot.slane %v1394, 1
    %v1443 = vrot.slane %v1396, 1
    %v1446 = vadd.f32 %v322, %v1442
    %v1447 = vadd.f32 %v323, %v1443
    %v1448 = vxor.u32 %v1446, 2147483648
    %v1449 = vxor.u32 %v1447, 2147483648
    %v1450 = vmul.f32 %v1448, 1.442695
    %v1451 = vpow.pop %v1450
    %v1452 = vmul.f32 %v1449, 1.442695
    %v1453 = vpow.pop %v1452
    %v1454 = vadd.f32 %v1451, 1.0
    %v1455 = vadd.f32 %v1453, 1.0
    %v1456 = vrcp.pop %v1454
    %v1457 = vmul.f32 1.0, %v1456
    %v1458 = vrcp.pop %v1455
    %v1459 = vmul.f32 1.0, %v1458
    %v1460 = vadd.f32 %v1435, %v317
    %v1462 = vrot.slane %v1460, 1
    %v1464 = vmul.f32 %v1457, %v1462
    %v1465 = vadd.f32 %v324, %v1464
    %v1466 = vtanh.pop %v1465
    %v1467 = vsub.f32 1.0, %v1459
    %v1468 = vmul.f32 %v1467, %v1466
    %v1470 = vrot.slane %v1351, 7
    %v1472 = vmul.f32 %v1459, %v1470
    %v1473 = vadd.f32 %v1468, %v1472
    %s1474 = scalar_select %p1354, 1, 0
    %v1475 = vstv %s1474
    %vm1476 = vcmp.eq.s32.totalorder %v1475, 1
    %v1477 = vsel %vm1476, %v1473, %v1470
    %v1478 = vsel %vm1476, %v1473, 0.0
    %vm1479 = vcmask 1040384
    %v1480 = vsel %vm1479, %v594, %v717
    %vm1481 = vcmask 1041408
    %v1482 = vsel %vm1481, %v1480, %v844
    %vm1483 = vcmask 1042432
    %v1484 = vsel %vm1483, %v1482, %v970
    %vm1485 = vcmask 1043456
    %v1486 = vsel %vm1485, %v1484, %v1098
    %vm1487 = vcmask 1044480
    %v1488 = vsel %vm1487, %v1486, %v1224
    %vm1489 = vcmask 1045504
    %v1490 = vsel %vm1489, %v1488, %v1352
    %vm1491 = vcmask 1046528
    %v1492 = vsel %vm1491, %v1490, %v1478
    %1493 = vst [vmem:[#allocation8] sm:$0xff] %v1492
    %1494 = vst [vmem:[%s7 - $0x7] sm:$0x80] %v1477
    // Predicated region
    $region34: #{encoder_rnn_forward.1} parent=1 // pred_check
      _
    $region35: #{encoder_rnn_forward.1} parent=1 // pred_check_branch
      %1496 = sbr.rel (0) target = $region37
    $region36: #{encoder_rnn_forward.1} parent=1 // pred_region
      %s1498 = ssub.s32 128, 128
      %1499 = vsyncadd [#allocation5], %s1498
      %s1501 = sshll.u32 [#allocation8], 4
      %s1502 = int_to_ptr.vmem [resolvable:$true] %s1501
      %1504 = dma.vmem_to_hbm [thread:$0]  %s1502, 128, %s6, [#allocation5]
    $region37: #{encoder_rnn_forward.1} parent=1 // pred_fallthru
      _
    // Predicated region
    $region38: #{encoder_rnn_forward.1} parent=1 // pred_check
      _
    $region39: #{encoder_rnn_forward.1} parent=1 // pred_check_branch
      %1506 = sbr.rel (0) target = $region41
    $region40: #{encoder_rnn_forward.1} parent=1 // pred_region
      _
    $region41: #{encoder_rnn_forward.1} parent=1 // pred_fallthru
      _
    // Predicated region
    $region42: #{encoder_rnn_forward.1} parent=1 // pred_check
      _
    $region43: #{encoder_rnn_forward.1} parent=1 // pred_check_branch
      %1508 = sbr.rel (0) target = $region45
    $region44: #{encoder_rnn_forward.1} parent=1 // pred_region
      %1509 = dma.done [#allocation5], 128
    $region45: #{encoder_rnn_forward.1} parent=1 // pred_fallthru
      _
    // Predicated region
    $region46: #{encoder_rnn_forward.1} parent=1 // pred_check
      _
    $region47: #{encoder_rnn_forward.1} parent=1 // pred_check_branch
      %1511 = sbr.rel (0) target = $region49
    $region48: #{encoder_rnn_forward.1} parent=1 // pred_region
      _
    $region49: #{encoder_rnn_forward.1} parent=1 // pred_fallthru
      _
    %1512 = vsyncpa [#allocation4], 1
    %1513 = vsyncpa [#allocation7], 1
    %1514 = vsyncpa [#allocation5], 1

</llo_original>
